<compile_context>
chip_gen: v6e
topology: v6e:2x2x1
jax: 0.10.0
libtpu: 0.0.40
codegen_flags: <defaults>
</compile_context>

<pallas_src>
import jax
import jax.numpy as jnp
from jax import lax
from jax.experimental import pallas as pl
from jax.experimental.pallas import tpu as pltpu


def _pick_tile_h(ho, wo):
    """Pick an output-row tile height TH (a divisor of `ho`).

    Prefer tiles whose flattened size TH*wo is a multiple of the 128-lane vreg
    width (lane-dense, unmasked stores) and that leave >= 2 grid steps per
    image so the pipeline can overlap DMA with compute and both v7x
    TensorCores get work.  Falls back to the whole image.
    """
    cands = [th for th in range(1, ho + 1)
             if ho % th == 0 and (th * wo) % 128 == 0 and th * wo <= 8192]
    if not cands:
        return ho
    multi = [th for th in cands if ho // th >= 2]
    return max(multi) if multi else max(cands)


def basic_conv(x_nchw, weight, bias, *, stride=(1, 1), padding=(0, 0)):
    """BasicConv forward: Conv2d(stride, padding) + ReLU.

    x_nchw : (N, Cin, H, W)       float32 (PyTorch NCHW)
    weight : (Cout, Cin, KH, KW)  float32 (PyTorch OIHW)
    bias   : (Cout,)              float32
    returns: (N, Cout, Ho, Wo)    float32 (NCHW, like the torch module)
    """
    N, Cin, H, W = x_nchw.shape
    Cout, Cin2, KH, KW = weight.shape
    assert Cin == Cin2, (Cin, Cin2)
    ph, pw = padding
    sh, sw = stride
    Hp, Wp = H + 2 * ph, W + 2 * pw
    Ho, Wo = Hp - KH + 1, Wp - KW + 1          # stride-1 output extents
    K = KH * KW * Cin                          # im2col contraction size
    TH = _pick_tile_h(Ho, Wo)                  # output rows per grid step
    n_th = Ho // TH
    P = TH * Wo                                # flattened spatial tile size

    # Channels-last input so the per-tap (TH, Wo, Cin) -> (TH*Wo, Cin)
    # flattening inside the kernel is a cheap leading-dim merge.  The output
    # side needs no transpose at all: the kernel stores (Cout, spatial) tiles,
    # i.e. NCHW directly.
    # TODO(synk): fold this input NCHW->NHWC transpose into the kernel's
    # scratch build (needs a minor-dim relayout) to drop the last host pass.
    x_nhwc = jnp.transpose(x_nchw, (0, 2, 3, 1))
    # Weight as (K, Cout) with rows ordered (kh, kw, cin) to match the im2col
    # column order assembled in the kernel.
    w2 = jnp.transpose(weight, (2, 3, 1, 0)).reshape(K, Cout)
    b2 = bias.reshape(1, Cout)

    def kernel(x_ref, w_ref, b_ref, o_ref, xpad_ref, col_ref):
        t = pl.program_id(1)

        # Build the zero-padded image in VMEM once per batch element.  The
        # tile axis is "arbitrary" (sequential on one core), so the scratch
        # persists across this image's row tiles; the input block index is
        # constant in t, so the image is DMA'd from HBM only once per batch.
        @pl.when(t == 0)
        def _():
            if ph or pw:
                xpad_ref[...] = jnp.zeros_like(xpad_ref)
            xpad_ref[ph:ph + H, pw:pw + W, :] = x_ref[0].astype(xpad_ref.dtype)

        row0 = pl.multiple_of(t * TH, TH)
        # im2col: gather the KH*KW shifted windows of this row tile into one
        # (P, K) VMEM patch (the W-shift lands on the XLU / masked stores),
        # so the whole tile is a single MXU matmul with contraction K.
        for kh in range(KH):
            band = xpad_ref[pl.ds(row0 + kh, TH), :, :]          # (TH, Wp, Cin)
            for kw in range(KW):
                tap = band[:, kw:kw + Wo, :].reshape(P, Cin)     # (P, Cin)
                j = (kh * KW + kw) * Cin
                col_ref[:, j:j + Cin] = tap

        acc = jnp.dot(col_ref[...], w_ref[...],
                      preferred_element_type=jnp.float32)        # (P, Cout)
        y = jnp.maximum(acc + b_ref[...], 0.0)                   # bias + ReLU (f32)
        # Lane-dense store: spatial axis (P, multiple of 128) on lanes,
        # channels on sublanes -> NCHW output with unmasked stores.
        o_ref[...] = y.T.reshape(1, Cout, P).astype(o_ref.dtype)

    out_flat = pl.pallas_call(
        kernel,
        out_shape=jax.ShapeDtypeStruct((N, Cout, Ho * Wo), x_nchw.dtype),
        grid=(N, n_th),
        in_specs=[
            pl.BlockSpec((1, H, W, Cin), lambda n, t: (n, 0, 0, 0)),
            pl.BlockSpec((K, Cout), lambda n, t: (0, 0)),
            pl.BlockSpec((1, Cout), lambda n, t: (0, 0)),
        ],
        out_specs=pl.BlockSpec((1, Cout, P), lambda n, t: (n, 0, t)),
        scratch_shapes=[
            pltpu.VMEM((Hp, Wp, Cin), jnp.float32),   # padded image (per batch)
            pltpu.VMEM((P, K), jnp.float32),          # im2col patch (per tile)
        ],
        compiler_params=pltpu.CompilerParams(
            dimension_semantics=("parallel", "arbitrary"),
            # Explicit budget: working set is tiny here, but an explicit limit
            # keeps the same tiling valid on v7x (64 MiB physical VMEM).
            vmem_limit_bytes=32 * 1024 * 1024,
        ),
    )(x_nhwc, w2, b2)

    out = out_flat.reshape(N, Cout, Ho, Wo)            # free reshape, NCHW
    if (sh, sw) != (1, 1):
        # TODO(synk): fold stride > 1 directly into the kernel's store instead
        # of subsampling the (exact) stride-1 result on the host.
        out = out[:, :, ::sh, ::sw]
    return out


# ----------------------------- pure-JAX reference ----------------------------


def _ref_basic_conv(x, w, b, stride, padding):
    y = lax.conv_general_dilated(
        x, w, window_strides=stride,
        padding=((padding[0], padding[0]), (padding[1], padding[1])),
        dimension_numbers=("NCHW", "OIHW", "NCHW"),
        precision=lax.Precision.HIGHEST)
    return jnp.maximum(y + b[None, :, None, None], 0.0)


def _init_params(key, cout, cin, kh, kw):
    kw_key, kb_key = jax.random.split(key)
    fan_in = cin * kh * kw
    s = 1.0 / (fan_in ** 0.5)
    w = jax.random.uniform(kw_key, (cout, cin, kh, kw), jnp.float32, -s, s)
    b = jax.random.uniform(kb_key, (cout,), jnp.float32, -s, s)
    return w, b


# ----------------------------------- main ------------------------------------


if __name__ == "__main__":
    key = jax.random.PRNGKey(0)
    kx, kp = jax.random.split(key)

    N, Cin, H, W = 2, 4, 16, 16
    x = jax.random.normal(kx, (N, Cin, H, W), jnp.float32)

    # Configurations BasicConv is used with inside GoogLeNet's Inception block.
    configs = [
        dict(cout=8, k=3, stride=(1, 1), padding=(1, 1)),
        dict(cout=8, k=1, stride=(1, 1), padding=(0, 0)),
        dict(cout=8, k=5, stride=(1, 1), padding=(2, 2)),
        dict(cout=8, k=3, stride=(2, 2), padding=(1, 1)),
    ]
    keys = jax.random.split(kp, len(configs))
    for cfg, k in zip(configs, keys):
        w, b = _init_params(k, cfg["cout"], Cin, cfg["k"], cfg["k"])
        out = jax.block_until_ready(
            basic_conv(x, w, b, stride=cfg["stride"], padding=cfg["padding"]))
        ref = jax.block_until_ready(
            _ref_basic_conv(x, w, b, cfg["stride"], cfg["padding"]))
        assert out.shape == ref.shape, (cfg, out.shape, ref.shape)
        err = float(jnp.max(jnp.abs(out - ref)))
        assert jnp.allclose(out, ref, atol=2e-3, rtol=2e-3), (cfg, err)

    print("KERNEL_OK")
</pallas_src>

<mosaic_0001>
module attributes {stable_mosaic.version = 11 : i64} {
  func.func @kernel(%arg0: i32, %arg1: i32, %arg2: memref<1x16x16x4xf32, #tpu.memory_space<vmem>>, %arg3: memref<36x8xf32, #tpu.memory_space<vmem>>, %arg4: memref<1x8xf32, #tpu.memory_space<vmem>>, %arg5: memref<1x8x128xf32, #tpu.memory_space<vmem>>, %arg6: memref<18x18x4xf32, #tpu.memory_space<vmem>>, %arg7: memref<128x36xf32, #tpu.memory_space<vmem>>) attributes {dimension_semantics = [#tpu.dimension_semantics<parallel>, #tpu.dimension_semantics<arbitrary>], iteration_bounds = array<i64: 2, 2>, scalar_prefetch = 0 : i64, scratch_operands = 2 : i64, tpu.core_type = #tpu.core_type<tc>, window_params = [{transform_indices = @transform_0, window_bounds = array<i64: 1, 16, 16, 4>}, {pipeline_mode = #tpu.pipeline_mode<synchronous>, transform_indices = @transform_1, window_bounds = array<i64: 36, 8>}, {pipeline_mode = #tpu.pipeline_mode<synchronous>, transform_indices = @transform_2, window_bounds = array<i64: 1, 8>}, {transform_indices = @transform_3, window_bounds = array<i64: 1, 8, 128>}]} {
    %c0_i32 = arith.constant 0 : i32
    %0 = arith.cmpi eq, %arg1, %c0_i32 : i32
    %1 = arith.extui %0 : i1 to i32
    %c0_i32_0 = arith.constant 0 : i32
    %2 = arith.cmpi ne, %1, %c0_i32_0 : i32
    scf.if %2 {
      %cst_27 = arith.constant 0.000000e+00 : f32
      %52 = vector.broadcast %cst_27 : f32 to vector<18x18x4xf32>
      %c0_28 = arith.constant 0 : index
      %c0_29 = arith.constant 0 : index
      %c0_30 = arith.constant 0 : index
      %53 = vector.load %arg6[%c0_28, %c0_29, %c0_30] : memref<18x18x4xf32, #tpu.memory_space<vmem>>, vector<18x18x4xf32>
      tpu.vector_store %arg6[%c0_28, %c0_29, %c0_30], %52 {strides = array<i32>} : memref<18x18x4xf32, #tpu.memory_space<vmem>>, vector<18x18x4xf32>,
      %c0_31 = arith.constant 0 : index
      %c0_32 = arith.constant 0 : index
      %c0_33 = arith.constant 0 : index
      %c0_34 = arith.constant 0 : index
      %54 = vector.load %arg2[%c0_31, %c0_32, %c0_33, %c0_34] : memref<1x16x16x4xf32, #tpu.memory_space<vmem>>, vector<1x16x16x4xf32>
      %55 = vector.shape_cast %54 : vector<1x16x16x4xf32> to vector<16x16x4xf32>
      %c1 = arith.constant 1 : index
      %c1_35 = arith.constant 1 : index
      %c0_36 = arith.constant 0 : index
      %56 = vector.load %arg6[%c1, %c1_35, %c0_36] : memref<18x18x4xf32, #tpu.memory_space<vmem>>, vector<16x16x4xf32>
      tpu.vector_store %arg6[%c1, %c1_35, %c0_36], %55 {strides = array<i32>} : memref<18x18x4xf32, #tpu.memory_space<vmem>>, vector<16x16x4xf32>,
    } else {
    }
    %c8_i32 = arith.constant 8 : i32
    %3 = arith.muli %arg1, %c8_i32 : i32
    %4 = tpu.assume_multiple %3, 8 : i32
    %c0_i32_1 = arith.constant 0 : i32
    %5 = arith.addi %4, %c0_i32_1 : i32
    %6 = arith.index_cast %5 : i32 to index
    %c0 = arith.constant 0 : index
    %c0_2 = arith.constant 0 : index
    %7 = vector.load %arg6[%6, %c0, %c0_2] : memref<18x18x4xf32, #tpu.memory_space<vmem>>, vector<8x18x4xf32>
    %8 = vector.extract_strided_slice %7 {offsets = [0, 0, 0], sizes = [8, 16, 4], strides = [1, 1, 1]} : vector<8x18x4xf32> to vector<8x16x4xf32>
    %9 = vector.shape_cast %8 : vector<8x16x4xf32> to vector<128x4xf32>
    %c0_3 = arith.constant 0 : index
    %c0_4 = arith.constant 0 : index
    %10 = vector.load %arg7[%c0_3, %c0_4] : memref<128x36xf32, #tpu.memory_space<vmem>>, vector<128x4xf32>
    tpu.vector_store %arg7[%c0_3, %c0_4], %9 {strides = array<i32>} : memref<128x36xf32, #tpu.memory_space<vmem>>, vector<128x4xf32>,
    %11 = vector.extract_strided_slice %7 {offsets = [0, 1, 0], sizes = [8, 16, 4], strides = [1, 1, 1]} : vector<8x18x4xf32> to vector<8x16x4xf32>
    %12 = vector.shape_cast %11 : vector<8x16x4xf32> to vector<128x4xf32>
    %c0_5 = arith.constant 0 : index
    %c4 = arith.constant 4 : index
    %13 = vector.load %arg7[%c0_5, %c4] : memref<128x36xf32, #tpu.memory_space<vmem>>, vector<128x4xf32>
    tpu.vector_store %arg7[%c0_5, %c4], %12 {strides = array<i32>} : memref<128x36xf32, #tpu.memory_space<vmem>>, vector<128x4xf32>,
    %14 = vector.extract_strided_slice %7 {offsets = [0, 2, 0], sizes = [8, 16, 4], strides = [1, 1, 1]} : vector<8x18x4xf32> to vector<8x16x4xf32>
    %15 = vector.shape_cast %14 : vector<8x16x4xf32> to vector<128x4xf32>
    %c0_6 = arith.constant 0 : index
    %c8 = arith.constant 8 : index
    %16 = vector.load %arg7[%c0_6, %c8] : memref<128x36xf32, #tpu.memory_space<vmem>>, vector<128x4xf32>
    tpu.vector_store %arg7[%c0_6, %c8], %15 {strides = array<i32>} : memref<128x36xf32, #tpu.memory_space<vmem>>, vector<128x4xf32>,
    %c1_i32 = arith.constant 1 : i32
    %17 = arith.addi %4, %c1_i32 : i32
    %18 = arith.index_cast %17 : i32 to index
    %c0_7 = arith.constant 0 : index
    %c0_8 = arith.constant 0 : index
    %19 = vector.load %arg6[%18, %c0_7, %c0_8] : memref<18x18x4xf32, #tpu.memory_space<vmem>>, vector<8x18x4xf32>
    %20 = vector.extract_strided_slice %19 {offsets = [0, 0, 0], sizes = [8, 16, 4], strides = [1, 1, 1]} : vector<8x18x4xf32> to vector<8x16x4xf32>
    %21 = vector.shape_cast %20 : vector<8x16x4xf32> to vector<128x4xf32>
    %c0_9 = arith.constant 0 : index
    %c12 = arith.constant 12 : index
    %22 = vector.load %arg7[%c0_9, %c12] : memref<128x36xf32, #tpu.memory_space<vmem>>, vector<128x4xf32>
    tpu.vector_store %arg7[%c0_9, %c12], %21 {strides = array<i32>} : memref<128x36xf32, #tpu.memory_space<vmem>>, vector<128x4xf32>,
    %23 = vector.extract_strided_slice %19 {offsets = [0, 1, 0], sizes = [8, 16, 4], strides = [1, 1, 1]} : vector<8x18x4xf32> to vector<8x16x4xf32>
    %24 = vector.shape_cast %23 : vector<8x16x4xf32> to vector<128x4xf32>
    %c0_10 = arith.constant 0 : index
    %c16 = arith.constant 16 : index
    %25 = vector.load %arg7[%c0_10, %c16] : memref<128x36xf32, #tpu.memory_space<vmem>>, vector<128x4xf32>
    tpu.vector_store %arg7[%c0_10, %c16], %24 {strides = array<i32>} : memref<128x36xf32, #tpu.memory_space<vmem>>, vector<128x4xf32>,
    %26 = vector.extract_strided_slice %19 {offsets = [0, 2, 0], sizes = [8, 16, 4], strides = [1, 1, 1]} : vector<8x18x4xf32> to vector<8x16x4xf32>
    %27 = vector.shape_cast %26 : vector<8x16x4xf32> to vector<128x4xf32>
    %c0_11 = arith.constant 0 : index
    %c20 = arith.constant 20 : index
    %28 = vector.load %arg7[%c0_11, %c20] : memref<128x36xf32, #tpu.memory_space<vmem>>, vector<128x4xf32>
    tpu.vector_store %arg7[%c0_11, %c20], %27 {strides = array<i32>} : memref<128x36xf32, #tpu.memory_space<vmem>>, vector<128x4xf32>,
    %c2_i32 = arith.constant 2 : i32
    %29 = arith.addi %4, %c2_i32 : i32
    %30 = arith.index_cast %29 : i32 to index
    %c0_12 = arith.constant 0 : index
    %c0_13 = arith.constant 0 : index
    %31 = vector.load %arg6[%30, %c0_12, %c0_13] : memref<18x18x4xf32, #tpu.memory_space<vmem>>, vector<8x18x4xf32>
    %32 = vector.extract_strided_slice %31 {offsets = [0, 0, 0], sizes = [8, 16, 4], strides = [1, 1, 1]} : vector<8x18x4xf32> to vector<8x16x4xf32>
    %33 = vector.shape_cast %32 : vector<8x16x4xf32> to vector<128x4xf32>
    %c0_14 = arith.constant 0 : index
    %c24 = arith.constant 24 : index
    %34 = vector.load %arg7[%c0_14, %c24] : memref<128x36xf32, #tpu.memory_space<vmem>>, vector<128x4xf32>
    tpu.vector_store %arg7[%c0_14, %c24], %33 {strides = array<i32>} : memref<128x36xf32, #tpu.memory_space<vmem>>, vector<128x4xf32>,
    %35 = vector.extract_strided_slice %31 {offsets = [0, 1, 0], sizes = [8, 16, 4], strides = [1, 1, 1]} : vector<8x18x4xf32> to vector<8x16x4xf32>
    %36 = vector.shape_cast %35 : vector<8x16x4xf32> to vector<128x4xf32>
    %c0_15 = arith.constant 0 : index
    %c28 = arith.constant 28 : index
    %37 = vector.load %arg7[%c0_15, %c28] : memref<128x36xf32, #tpu.memory_space<vmem>>, vector<128x4xf32>
    tpu.vector_store %arg7[%c0_15, %c28], %36 {strides = array<i32>} : memref<128x36xf32, #tpu.memory_space<vmem>>, vector<128x4xf32>,
    %38 = vector.extract_strided_slice %31 {offsets = [0, 2, 0], sizes = [8, 16, 4], strides = [1, 1, 1]} : vector<8x18x4xf32> to vector<8x16x4xf32>
    %39 = vector.shape_cast %38 : vector<8x16x4xf32> to vector<128x4xf32>
    %c0_16 = arith.constant 0 : index
    %c32 = arith.constant 32 : index
    %40 = vector.load %arg7[%c0_16, %c32] : memref<128x36xf32, #tpu.memory_space<vmem>>, vector<128x4xf32>
    tpu.vector_store %arg7[%c0_16, %c32], %39 {strides = array<i32>} : memref<128x36xf32, #tpu.memory_space<vmem>>, vector<128x4xf32>,
    %c0_17 = arith.constant 0 : index
    %c0_18 = arith.constant 0 : index
    %41 = vector.load %arg7[%c0_17, %c0_18] : memref<128x36xf32, #tpu.memory_space<vmem>>, vector<128x36xf32>
    %c0_19 = arith.constant 0 : index
    %c0_20 = arith.constant 0 : index
    %42 = vector.load %arg3[%c0_19, %c0_20] : memref<36x8xf32, #tpu.memory_space<vmem>>, vector<36x8xf32>
    %cst = arith.constant dense<0.000000e+00> : vector<128x8xf32>
    %43 = tpu.matmul %41, %42, %cst {dimension_numbers = #tpu.dot_dimension_numbers<[1], [0], [0], [1], [0, 0, 1, 1], [], []>} : vector<128x36xf32>, vector<36x8xf32>, vector<128x8xf32> -> vector<128x8xf32>
    %c0_21 = arith.constant 0 : index
    %c0_22 = arith.constant 0 : index
    %44 = vector.load %arg4[%c0_21, %c0_22] : memref<1x8xf32, #tpu.memory_space<vmem>>, vector<1x8xf32>
    %45 = vector.broadcast %44 : vector<1x8xf32> to vector<128x8xf32>
    %46 = arith.addf %43, %45 : vector<128x8xf32>
    %cst_23 = arith.constant 0.000000e+00 : f32
    %47 = vector.broadcast %cst_23 : f32 to vector<128x8xf32>
    %48 = arith.maximumf %46, %47 : vector<128x8xf32>
    %49 = tpu.transpose %48, [1, 0] : vector<128x8xf32> -> vector<8x128xf32>
    %50 = vector.shape_cast %49 : vector<8x128xf32> to vector<1x8x128xf32>
    %c0_24 = arith.constant 0 : index
    %c0_25 = arith.constant 0 : index
    %c0_26 = arith.constant 0 : index
    %51 = vector.load %arg5[%c0_24, %c0_25, %c0_26] : memref<1x8x128xf32, #tpu.memory_space<vmem>>, vector<1x8x128xf32>
    tpu.vector_store %arg5[%c0_24, %c0_25, %c0_26], %50 {strides = array<i32>} : memref<1x8x128xf32, #tpu.memory_space<vmem>>, vector<1x8x128xf32>,
    return
  }
  func.func @transform_0(%arg0: i32, %arg1: i32) -> (i32, i32, i32, i32) {
    %c0_i32 = arith.constant 0 : i32
    %c0_i32_0 = arith.constant 0 : i32
    %c0_i32_1 = arith.constant 0 : i32
    %c0_i32_2 = arith.constant 0 : i32
    return %arg0, %c0_i32, %c0_i32_0, %c0_i32_1 : i32, i32, i32, i32
  }
  func.func @transform_1(%arg0: i32, %arg1: i32) -> (i32, i32) {
    %c0_i32 = arith.constant 0 : i32
    %c0_i32_0 = arith.constant 0 : i32
    %c0_i32_1 = arith.constant 0 : i32
    return %c0_i32, %c0_i32_0 : i32, i32
  }
  func.func @transform_2(%arg0: i32, %arg1: i32) -> (i32, i32) {
    %c0_i32 = arith.constant 0 : i32
    %c0_i32_0 = arith.constant 0 : i32
    %c0_i32_1 = arith.constant 0 : i32
    return %c0_i32, %c0_i32_0 : i32, i32
  }
  func.func @transform_3(%arg0: i32, %arg1: i32) -> (i32, i32, i32) {
    %c0_i32 = arith.constant 0 : i32
    %c0_i32_0 = arith.constant 0 : i32
    return %arg0, %c0_i32, %arg1 : i32, i32, i32
  }
}

</mosaic_0001>

<llo_original>
// kernel: tpu_custom_call.1
$region0: #{tpu_custom_call.1}
  #allocation0 [shape = 'u32[]', space=smem, size = 0x4, offset = 0x4, fixed_abs, tag = 'smem constant byte address 0x4 - core index']
  #allocation1 [shape = 'u32[144,128]{1,0:T(1,128)}', space=vmem, size = 0x12000, scoped, tag = 'internal scratch']
  #allocation2 [shape = 'f32[18,18,4]{2,1,0:T(8,128)}', space=vmem, size = 0x36000, scoped, tag = 'scratch operand']
  #allocation3 [shape = 'f32[128,36]{1,0:T(8,128)}', space=vmem, size = 0x10000, scoped, tag = 'scratch operand']
  %s0 = inlined_call_operand.vmem [shape: f32[2,16,16,4], index: 0, kind: input, shape index: {}]
  %s1 = inlined_call_operand.vmem [shape: f32[36,8], index: 1, kind: input, shape index: {}]
  %s2 = inlined_call_operand.vmem [shape: f32[1,8], index: 2, kind: input, shape index: {}]
  %s3 = inlined_call_operand.hbm [shape: f32[2,8,256], index: 3, kind: output, shape index: {}]
  %s4 = sld [smem:[#allocation0]]
  $region49: #{tpu_custom_call.1} parent=0
    _
  %s6 = ssub.s32 1, %s4
  %s7 = scalar_select 0, %s6, %s4
  $region1: #{tpu_custom_call.1} parent=0
    #allocation4 [shape = 'u8[8192]{0}', space=vmem, size = 0x2000, scoped, tag = 'output window, operand 0']
    #allocation5 [shape = 's32[2]{0}', space=sflag, size = 0x8, scoped, tag = 'scoped memory for tpu_custom_call.1']
    %8 = vsyncpa [#allocation5], 0
    %s9 = scalar_lea.sflag [#allocation5], 1
    %10 = vsyncpa %s9, 0
    loop: start=0, step=1, limit=6
    $region2: #{tpu_custom_call.1} parent=1 // loop_pre_header
      _
    $region3: #{tpu_custom_call.1} parent=1 // loop_header
      %s12 = sphi 0, %s16
      %p13 = scmp.ge.s32.totalorder %s12, 6
      %s19 = sphi 0, %s31
      %s20 = sphi 0, %s27
      %s21 = sphi 0, %s19
      %s22 = sphi 0, %s20
      %s23 = sphi 0, %s21
      %s24 = sphi 0, %s22
      %s34 = sphi 0, %s36
      %s37 = sphi 0, %s34
      %s38 = sphi 0, %s37
      %s54 = sphi 0, %s38
      %s58 = sphi 0, %s58
      %s60 = sphi 0, %s58
      %s61 = sphi 0, %s60
      %s75 = sphi 0, %s61
      %s79 = sphi 0, %s79
      %s81 = sphi 0, %s79
      %s82 = sphi 0, %s81
      %s96 = sphi 0, %s82
      %s104 = sphi 0, %s106
      %s107 = sphi 0, %s104
      %s108 = sphi 0, %s107
      %s124 = sphi 0, %s108
    $region4: #{tpu_custom_call.1} parent=1 // loop_header_branch
      %15 = sbr.rel (%p13) target = $region8
    $region5: #{tpu_custom_call.1} parent=1 // loop_body
      %s17 = ssub.s32 %s12, 1
      %s18 = ssub.s32 %s12, 2
      %s25 = sadd.s32 1, %s20
      %p26 = scmp.ge.s32.totalorder %s25, 2
      %s27 = scalar_select %p26, 0, %s25
      %s28 = sadd.s32 1, %s19
      %s29 = scalar_select %p26, %s28, %s19
      %p30 = scmp.ge.s32.totalorder %s29, 2
      %s31 = scalar_select %p30, 0, %s29
      %s32 = ssub.s32 %s19, %s31
      %p33 = scmp.eq.s32.totalorder %s32, 0
      %s35 = sadd.s32 %s34, 1
      %s36 = scalar_select %p33, %s34, %s35
      %p39 = pneg %p33
      %p40 = scmp.eq.s32.totalorder %s12, 3
      %p41 = por %p39, %p40
      %p42 = scmp.ne.s32.totalorder %s34, %s37
      %p43 = scmp.eq.s32.totalorder %s12, 0
      %p44 = por %p42, %p43
      %p45 = scmp.ne.s32.totalorder %s34, %s37
      %p46 = scmp.eq.s32.totalorder %s17, 3
      %p47 = por %p45, %p46
      %p48 = scmp.ne.s32.totalorder %s37, %s38
      %p49 = scmp.eq.s32.totalorder %s17, 0
      %p50 = por %p48, %p49
      %p51 = scmp.ne.s32.totalorder %s37, %s38
      %p52 = scmp.eq.s32.totalorder %s18, 3
      %p53 = por %p51, %p52
      %p55 = scmp.ne.s32.totalorder %s38, %s54
      %p56 = scmp.eq.s32.totalorder %s18, 0
      %p57 = por %p55, %p56
      %s59 = sadd.s32 %s58, 1
      %p62 = scmp.eq.s32.totalorder %s12, 3
      %p63 = scmp.ne.s32.totalorder %s58, %s60
      %p64 = scmp.eq.s32.totalorder %s12, 0
      %p65 = por %p63, %p64
      %p66 = scmp.ne.s32.totalorder %s58, %s60
      %p67 = scmp.eq.s32.totalorder %s17, 3
      %p68 = por %p66, %p67
      %p69 = scmp.ne.s32.totalorder %s60, %s61
      %p70 = scmp.eq.s32.totalorder %s17, 0
      %p71 = por %p69, %p70
      %p72 = scmp.ne.s32.totalorder %s60, %s61
      %p73 = scmp.eq.s32.totalorder %s18, 3
      %p74 = por %p72, %p73
      %p76 = scmp.ne.s32.totalorder %s61, %s75
      %p77 = scmp.eq.s32.totalorder %s18, 0
      %p78 = por %p76, %p77
      %s80 = sadd.s32 %s79, 1
      %p83 = scmp.eq.s32.totalorder %s12, 3
      %p84 = scmp.ne.s32.totalorder %s79, %s81
      %p85 = scmp.eq.s32.totalorder %s12, 0
      %p86 = por %p84, %p85
      %p87 = scmp.ne.s32.totalorder %s79, %s81
      %p88 = scmp.eq.s32.totalorder %s17, 3
      %p89 = por %p87, %p88
      %p90 = scmp.ne.s32.totalorder %s81, %s82
      %p91 = scmp.eq.s32.totalorder %s17, 0
      %p92 = por %p90, %p91
      %p93 = scmp.ne.s32.totalorder %s81, %s82
      %p94 = scmp.eq.s32.totalorder %s18, 3
      %p95 = por %p93, %p94
      %p97 = scmp.ne.s32.totalorder %s82, %s96
      %p98 = scmp.eq.s32.totalorder %s18, 0
      %p99 = por %p97, %p98
      %s100 = ssub.s32 %s19, %s31
      %s101 = ssub.s32 %s20, %s27
      %s102 = sor.u32 %s100, %s101
      %p103 = scmp.eq.s32.totalorder %s102, 0
      %s105 = sadd.s32 %s104, 1
      %s106 = scalar_select %p103, %s104, %s105
      %p109 = pneg %p103
      %p110 = scmp.eq.s32.totalorder %s12, 3
      %p111 = por %p109, %p110
      %p112 = scmp.ne.s32.totalorder %s104, %s107
      %p113 = scmp.eq.s32.totalorder %s12, 0
      %p114 = por %p112, %p113
      %p115 = scmp.ne.s32.totalorder %s104, %s107
      %p116 = scmp.eq.s32.totalorder %s17, 3
      %p117 = por %p115, %p116
      %p118 = scmp.ne.s32.totalorder %s107, %s108
      %p119 = scmp.eq.s32.totalorder %s17, 0
      %p120 = por %p118, %p119
      %p121 = scmp.ne.s32.totalorder %s107, %s108
      %p122 = scmp.eq.s32.totalorder %s18, 3
      %p123 = por %p121, %p122
      %p125 = scmp.ne.s32.totalorder %s108, %s124
      %p126 = scmp.eq.s32.totalorder %s18, 0
      %p127 = por %p125, %p126
      %p128 = scmp.le.s32.totalorder 1, %s12
      %p129 = scmp.lt.s32.totalorder %s12, 5
      %p130 = pnand %p128, %p129
      %p131 = pneg %p130
      // Predicated region
      $region9: #{tpu_custom_call.1} parent=5 // pred_check
        _
      $region10: #{tpu_custom_call.1} parent=5 // pred_check_branch
        %133 = sbr.rel (%p130) target = $region12
      $region11: #{tpu_custom_call.1} parent=5 // pred_region
        %s134 = ssub.s32 %s12, 1
        // Predicated region
        $region13: #{tpu_custom_call.1} parent=11 // pred_check
          %p135 = pneg %p71
        $region14: #{tpu_custom_call.1} parent=11 // pred_check_branch
          %137 = sbr.rel (%p135) target = $region16
        $region15: #{tpu_custom_call.1} parent=11 // pred_region
          _
        $region16: #{tpu_custom_call.1} parent=11 // pred_fallthru
          _
        // Predicated region
        $region17: #{tpu_custom_call.1} parent=11 // pred_check
          %p138 = pneg %p92
        $region18: #{tpu_custom_call.1} parent=11 // pred_check_branch
          %140 = sbr.rel (%p138) target = $region20
        $region19: #{tpu_custom_call.1} parent=11 // pred_region
          _
        $region20: #{tpu_custom_call.1} parent=11 // pred_fallthru
          _
      $region12: #{tpu_custom_call.1} parent=5 // pred_fallthru
        _
      %p141 = scmp.lt.s32.totalorder %s12, 4
      // Predicated region
      $region21: #{tpu_custom_call.1} parent=5 // pred_check
        %p142 = pneg %p141
      $region22: #{tpu_custom_call.1} parent=5 // pred_check_branch
        %144 = sbr.rel (%p142) target = $region24
      $region23: #{tpu_custom_call.1} parent=5 // pred_region
        // Predicated region
        $region25: #{tpu_custom_call.1} parent=23 // pred_check
          %p145 = pneg %p44
        $region26: #{tpu_custom_call.1} parent=23 // pred_check_branch
          %147 = sbr.rel (%p145) target = $region28
        $region27: #{tpu_custom_call.1} parent=23 // pred_region
          %p148 = scmp.lt.s32.totalorder %s19, 1
          %s149 = scalar_select %p148, %s19, 1
          %s150 = smul.addr %s149, 32
          %s151 = smul.addr %s150, 8
          %s152 = scalar_lea.vmem %s0, %s151
        $region28: #{tpu_custom_call.1} parent=23 // pred_fallthru
          _
      $region24: #{tpu_custom_call.1} parent=5 // pred_fallthru
        _
      %p153 = scmp.le.s32.totalorder 1, %s12
      %p154 = scmp.lt.s32.totalorder %s12, 5
      %p155 = pnand %p153, %p154
      %p156 = pneg %p155
      // Predicated region
      $region29: #{tpu_custom_call.1} parent=5 // pred_check
        _
      $region30: #{tpu_custom_call.1} parent=5 // pred_check_branch
        %158 = sbr.rel (%p155) target = $region32
      $region31: #{tpu_custom_call.1} parent=5 // pred_region
        %s159 = ssub.s32 %s12, 1
        %p160 = scmp.lt.s32.totalorder %s21, 1
        %s161 = scalar_select %p160, %s21, 1
        %s162 = smul.addr %s161, 32
        %s163 = smul.addr %s162, 8
        %s164 = scalar_lea.vmem %s0, %s163
        %p165 = pneg %p50
        %p166 = pneg %p47
        %p167 = pneg %p71
        %p168 = pneg %p68
        %p169 = pneg %p92
        %p170 = pneg %p89
        %p171 = pneg %p120
        %p172 = pneg %p117
        %s173 = sand.u32 %s107, 1
        %s174 = scalar_lea.sflag [#allocation5], %s173
        %s175 = sand.u32 %s107, 1
        %s176 = smul.addr %s175, 8
        %s177 = scalar_lea.vmem [#allocation4], %s176
        %p178 = scmp.lt.s32.totalorder %s21, 1
        %s179 = scalar_select %p178, %s21, 1
        %s180 = smul.addr %s179, 32
        %s181 = smul.addr %s180, 8
        %s182 = scalar_lea.vmem %s0, %s181
        %p183 = scmp.eq.s32.totalorder %s22, 0
        // Predicated region
        $region33: #{tpu_custom_call.1} parent=31 // pred_check
          %p184 = pneg %p183
        $region34: #{tpu_custom_call.1} parent=31 // pred_check_branch
          %186 = sbr.rel (%p184) target = $region36
        $region35: #{tpu_custom_call.1} parent=31 // pred_region
          %vm187 = vcmask 31744
          %188 = vst.msk [vmem:[#allocation2] sm:$0xff] %vm187, 0.0
          %189 = vst.msk [vmem:[#allocation2 + $0x8] sm:$0xff] %vm187, 0.0
          %vm190 = vcmask 25600
          %191 = vst.msk [vmem:[#allocation2 + $0x10] sm:$0x3] %vm190, 0.0
          %192 = vst.msk [vmem:[#allocation2 + $0x18] sm:$0xff] %vm187, 0.0
          %193 = vst.msk [vmem:[#allocation2 + $0x20] sm:$0xff] %vm187, 0.0
          %194 = vst.msk [vmem:[#allocation2 + $0x28] sm:$0x3] %vm190, 0.0
          %195 = vst.msk [vmem:[#allocation2 + $0x30] sm:$0xff] %vm187, 0.0
          %196 = vst.msk [vmem:[#allocation2 + $0x38] sm:$0xff] %vm187, 0.0
          %197 = vst.msk [vmem:[#allocation2 + $0x40] sm:$0x3] %vm190, 0.0
          %198 = vst.msk [vmem:[#allocation2 + $0x48] sm:$0xff] %vm187, 0.0
          %199 = vst.msk [vmem:[#allocation2 + $0x50] sm:$0xff] %vm187, 0.0
          %200 = vst.msk [vmem:[#allocation2 + $0x58] sm:$0x3] %vm190, 0.0
          %201 = vst.msk [vmem:[#allocation2 + $0x60] sm:$0xff] %vm187, 0.0
          %202 = vst.msk [vmem:[#allocation2 + $0x68] sm:$0xff] %vm187, 0.0
          %203 = vst.msk [vmem:[#allocation2 + $0x70] sm:$0x3] %vm190, 0.0
          %204 = vst.msk [vmem:[#allocation2 + $0x78] sm:$0xff] %vm187, 0.0
          %205 = vst.msk [vmem:[#allocation2 + $0x80] sm:$0xff] %vm187, 0.0
          %206 = vst.msk [vmem:[#allocation2 + $0x88] sm:$0x3] %vm190, 0.0
          %207 = vst.msk [vmem:[#allocation2 + $0x90] sm:$0xff] %vm187, 0.0
          %208 = vst.msk [vmem:[#allocation2 + $0x98] sm:$0xff] %vm187, 0.0
          %209 = vst.msk [vmem:[#allocation2 + $0xa0] sm:$0x3] %vm190, 0.0
          %210 = vst.msk [vmem:[#allocation2 + $0xa8] sm:$0xff] %vm187, 0.0
          %211 = vst.msk [vmem:[#allocation2 + $0xb0] sm:$0xff] %vm187, 0.0
          %212 = vst.msk [vmem:[#allocation2 + $0xb8] sm:$0x3] %vm190, 0.0
          %213 = vst.msk [vmem:[#allocation2 + $0xc0] sm:$0xff] %vm187, 0.0
          %214 = vst.msk [vmem:[#allocation2 + $0xc8] sm:$0xff] %vm187, 0.0
          %215 = vst.msk [vmem:[#allocation2 + $0xd0] sm:$0x3] %vm190, 0.0
          %216 = vst.msk [vmem:[#allocation2 + $0xd8] sm:$0xff] %vm187, 0.0
          %217 = vst.msk [vmem:[#allocation2 + $0xe0] sm:$0xff] %vm187, 0.0
          %218 = vst.msk [vmem:[#allocation2 + $0xe8] sm:$0x3] %vm190, 0.0
          %219 = vst.msk [vmem:[#allocation2 + $0xf0] sm:$0xff] %vm187, 0.0
          %220 = vst.msk [vmem:[#allocation2 + $0xf8] sm:$0xff] %vm187, 0.0
          %221 = vst.msk [vmem:[#allocation2 + $0x100] sm:$0x3] %vm190, 0.0
          %222 = vst.msk [vmem:[#allocation2 + $0x108] sm:$0xff] %vm187, 0.0
          %223 = vst.msk [vmem:[#allocation2 + $0x110] sm:$0xff] %vm187, 0.0
          %224 = vst.msk [vmem:[#allocation2 + $0x118] sm:$0x3] %vm190, 0.0
          %225 = vst.msk [vmem:[#allocation2 + $0x120] sm:$0xff] %vm187, 0.0
          %226 = vst.msk [vmem:[#allocation2 + $0x128] sm:$0xff] %vm187, 0.0
          %227 = vst.msk [vmem:[#allocation2 + $0x130] sm:$0x3] %vm190, 0.0
          %228 = vst.msk [vmem:[#allocation2 + $0x138] sm:$0xff] %vm187, 0.0
          %229 = vst.msk [vmem:[#allocation2 + $0x140] sm:$0xff] %vm187, 0.0
          %230 = vst.msk [vmem:[#allocation2 + $0x148] sm:$0x3] %vm190, 0.0
          %231 = vst.msk [vmem:[#allocation2 + $0x150] sm:$0xff] %vm187, 0.0
          %232 = vst.msk [vmem:[#allocation2 + $0x158] sm:$0xff] %vm187, 0.0
          %233 = vst.msk [vmem:[#allocation2 + $0x160] sm:$0x3] %vm190, 0.0
          %234 = vst.msk [vmem:[#allocation2 + $0x168] sm:$0xff] %vm187, 0.0
          %235 = vst.msk [vmem:[#allocation2 + $0x170] sm:$0xff] %vm187, 0.0
          %236 = vst.msk [vmem:[#allocation2 + $0x178] sm:$0x3] %vm190, 0.0
          %237 = vst.msk [vmem:[#allocation2 + $0x180] sm:$0xff] %vm187, 0.0
          %238 = vst.msk [vmem:[#allocation2 + $0x188] sm:$0xff] %vm187, 0.0
          %239 = vst.msk [vmem:[#allocation2 + $0x190] sm:$0x3] %vm190, 0.0
          %240 = vst.msk [vmem:[#allocation2 + $0x198] sm:$0xff] %vm187, 0.0
          %241 = vst.msk [vmem:[#allocation2 + $0x1a0] sm:$0xff] %vm187, 0.0
          %242 = vst.msk [vmem:[#allocation2 + $0x1a8] sm:$0x3] %vm190, 0.0
          %v243 = vld [vmem:[%s182] sm:$0xff]
          %v244 = vld [vmem:[%s182 + $0x8] sm:$0xff]
          %v245 = vld [vmem:[%s182 + $0x10] sm:$0xff]
          %v246 = vld [vmem:[%s182 + $0x18] sm:$0xff]
          %v247 = vld [vmem:[%s182 + $0x20] sm:$0xff]
          %v248 = vld [vmem:[%s182 + $0x28] sm:$0xff]
          %v249 = vld [vmem:[%s182 + $0x30] sm:$0xff]
          %v250 = vld [vmem:[%s182 + $0x38] sm:$0xff]
          %v251 = vld [vmem:[%s182 + $0x40] sm:$0xff]
          %v252 = vld [vmem:[%s182 + $0x48] sm:$0xff]
          %v253 = vld [vmem:[%s182 + $0x50] sm:$0xff]
          %v254 = vld [vmem:[%s182 + $0x58] sm:$0xff]
          %v255 = vld [vmem:[%s182 + $0x60] sm:$0xff]
          %v256 = vld [vmem:[%s182 + $0x68] sm:$0xff]
          %v257 = vld [vmem:[%s182 + $0x70] sm:$0xff]
          %v258 = vld [vmem:[%s182 + $0x78] sm:$0xff]
          %v259 = vld [vmem:[%s182 + $0x80] sm:$0xff]
          %v260 = vld [vmem:[%s182 + $0x88] sm:$0xff]
          %v261 = vld [vmem:[%s182 + $0x90] sm:$0xff]
          %v262 = vld [vmem:[%s182 + $0x98] sm:$0xff]
          %v263 = vld [vmem:[%s182 + $0xa0] sm:$0xff]
          %v264 = vld [vmem:[%s182 + $0xa8] sm:$0xff]
          %v265 = vld [vmem:[%s182 + $0xb0] sm:$0xff]
          %v266 = vld [vmem:[%s182 + $0xb8] sm:$0xff]
          %v267 = vld [vmem:[%s182 + $0xc0] sm:$0xff]
          %v268 = vld [vmem:[%s182 + $0xc8] sm:$0xff]
          %v269 = vld [vmem:[%s182 + $0xd0] sm:$0xff]
          %v270 = vld [vmem:[%s182 + $0xd8] sm:$0xff]
          %v271 = vld [vmem:[%s182 + $0xe0] sm:$0xff]
          %v272 = vld [vmem:[%s182 + $0xe8] sm:$0xff]
          %v273 = vld [vmem:[%s182 + $0xf0] sm:$0xff]
          %v274 = vld [vmem:[%s182 + $0xf8] sm:$0xff]
          %s275 = scalar_lea.vmem [#allocation2], 24
          %276 = vst.msk [vmem:[%s275 + $0x1] sm:$0xff] %vm187, %v243
          %277 = vst.msk [vmem:[%s275 + $0x9] sm:$0xff] %vm187, %v244
          %278 = vst.msk [vmem:[%s275 + $0x19] sm:$0xff] %vm187, %v245
          %279 = vst.msk [vmem:[%s275 + $0x21] sm:$0xff] %vm187, %v246
          %280 = vst.msk [vmem:[%s275 + $0x31] sm:$0xff] %vm187, %v247
          %281 = vst.msk [vmem:[%s275 + $0x39] sm:$0xff] %vm187, %v248
          %282 = vst.msk [vmem:[%s275 + $0x49] sm:$0xff] %vm187, %v249
          %283 = vst.msk [vmem:[%s275 + $0x51] sm:$0xff] %vm187, %v250
          %284 = vst.msk [vmem:[%s275 + $0x61] sm:$0xff] %vm187, %v251
          %285 = vst.msk [vmem:[%s275 + $0x69] sm:$0xff] %vm187, %v252
          %286 = vst.msk [vmem:[%s275 + $0x79] sm:$0xff] %vm187, %v253
          %287 = vst.msk [vmem:[%s275 + $0x81] sm:$0xff] %vm187, %v254
          %288 = vst.msk [vmem:[%s275 + $0x91] sm:$0xff] %vm187, %v255
          %289 = vst.msk [vmem:[%s275 + $0x99] sm:$0xff] %vm187, %v256
          %290 = vst.msk [vmem:[%s275 + $0xa9] sm:$0xff] %vm187, %v257
          %291 = vst.msk [vmem:[%s275 + $0xb1] sm:$0xff] %vm187, %v258
          %292 = vst.msk [vmem:[%s275 + $0xc1] sm:$0xff] %vm187, %v259
          %293 = vst.msk [vmem:[%s275 + $0xc9] sm:$0xff] %vm187, %v260
          %294 = vst.msk [vmem:[%s275 + $0xd9] sm:$0xff] %vm187, %v261
          %295 = vst.msk [vmem:[%s275 + $0xe1] sm:$0xff] %vm187, %v262
          %296 = vst.msk [vmem:[%s275 + $0xf1] sm:$0xff] %vm187, %v263
          %297 = vst.msk [vmem:[%s275 + $0xf9] sm:$0xff] %vm187, %v264
          %298 = vst.msk [vmem:[%s275 + $0x109] sm:$0xff] %vm187, %v265
          %299 = vst.msk [vmem:[%s275 + $0x111] sm:$0xff] %vm187, %v266
          %300 = vst.msk [vmem:[%s275 + $0x121] sm:$0xff] %vm187, %v267
          %301 = vst.msk [vmem:[%s275 + $0x129] sm:$0xff] %vm187, %v268
          %302 = vst.msk [vmem:[%s275 + $0x139] sm:$0xff] %vm187, %v269
          %303 = vst.msk [vmem:[%s275 + $0x141] sm:$0xff] %vm187, %v270
          %304 = vst.msk [vmem:[%s275 + $0x151] sm:$0xff] %vm187, %v271
          %305 = vst.msk [vmem:[%s275 + $0x159] sm:$0xff] %vm187, %v272
          %306 = vst.msk [vmem:[%s275 + $0x169] sm:$0xff] %vm187, %v273
          %307 = vst.msk [vmem:[%s275 + $0x171] sm:$0xff] %vm187, %v274
        $region36: #{tpu_custom_call.1} parent=31 // pred_fallthru
          _
        %s308 = smul.u32 %s22, 8
        %s309 = smul.u32 %s308, 24
        %s310 = scalar_lea.vmem [#allocation2], %s309
        %v311 = vld [vmem:[%s310] sm:$0xff]
        %v312 = vld [vmem:[%s310 + $0x8] sm:$0xff]
        %v313 = vld [vmem:[%s310 + $0x10] sm:$0x3]
        %v314 = vld [vmem:[%s310 + $0x18] sm:$0xff]
        %v315 = vld [vmem:[%s310 + $0x20] sm:$0xff]
        %v316 = vld [vmem:[%s310 + $0x28] sm:$0x3]
        %v317 = vld [vmem:[%s310 + $0x30] sm:$0xff]
        %v318 = vld [vmem:[%s310 + $0x38] sm:$0xff]
        %v319 = vld [vmem:[%s310 + $0x40] sm:$0x3]
        %v320 = vld [vmem:[%s310 + $0x48] sm:$0xff]
        %v321 = vld [vmem:[%s310 + $0x50] sm:$0xff]
        %v322 = vld [vmem:[%s310 + $0x58] sm:$0x3]
        %v323 = vld [vmem:[%s310 + $0x60] sm:$0xff]
        %v324 = vld [vmem:[%s310 + $0x68] sm:$0xff]
        %v325 = vld [vmem:[%s310 + $0x70] sm:$0x3]
        %v326 = vld [vmem:[%s310 + $0x78] sm:$0xff]
        %v327 = vld [vmem:[%s310 + $0x80] sm:$0xff]
        %v328 = vld [vmem:[%s310 + $0x88] sm:$0x3]
        %v329 = vld [vmem:[%s310 + $0x90] sm:$0xff]
        %v330 = vld [vmem:[%s310 + $0x98] sm:$0xff]
        %v331 = vld [vmem:[%s310 + $0xa0] sm:$0x3]
        %v332 = vld [vmem:[%s310 + $0xa8] sm:$0xff]
        %v333 = vld [vmem:[%s310 + $0xb0] sm:$0xff]
        %v334 = vld [vmem:[%s310 + $0xb8] sm:$0x3]
        %vm335 = vcmask 31744
        %336 = vst.msk [vmem:[#allocation3] sm:$0xff] %vm335, %v311
        %337 = vst.msk [vmem:[#allocation3 + $0x8] sm:$0xff] %vm335, %v312
        %338 = vst.msk [vmem:[#allocation3 + $0x10] sm:$0xff] %vm335, %v314
        %339 = vst.msk [vmem:[#allocation3 + $0x18] sm:$0xff] %vm335, %v315
        %340 = vst.msk [vmem:[#allocation3 + $0x20] sm:$0xff] %vm335, %v317
        %341 = vst.msk [vmem:[#allocation3 + $0x28] sm:$0xff] %vm335, %v318
        %342 = vst.msk [vmem:[#allocation3 + $0x30] sm:$0xff] %vm335, %v320
        %343 = vst.msk [vmem:[#allocation3 + $0x38] sm:$0xff] %vm335, %v321
        %344 = vst.msk [vmem:[#allocation3 + $0x40] sm:$0xff] %vm335, %v323
        %345 = vst.msk [vmem:[#allocation3 + $0x48] sm:$0xff] %vm335, %v324
        %346 = vst.msk [vmem:[#allocation3 + $0x50] sm:$0xff] %vm335, %v326
        %347 = vst.msk [vmem:[#allocation3 + $0x58] sm:$0xff] %vm335, %v327
        %348 = vst.msk [vmem:[#allocation3 + $0x60] sm:$0xff] %vm335, %v329
        %349 = vst.msk [vmem:[#allocation3 + $0x68] sm:$0xff] %vm335, %v330
        %350 = vst.msk [vmem:[#allocation3 + $0x70] sm:$0xff] %vm335, %v332
        %351 = vst.msk [vmem:[#allocation3 + $0x78] sm:$0xff] %vm335, %v333
        %vm376 = vcmask 1046528
        %v377 = vrot.slane %v311, 1
        %v378 = vrot.slane %v312, 1
        %v379 = vsel %vm376, %v377, %v378
        %v380 = vrot.slane %v313, 1
        %v381 = vsel %vm376, %v378, %v380
        %v382 = vrot.slane %v314, 1
        %v383 = vrot.slane %v315, 1
        %v384 = vsel %vm376, %v382, %v383
        %v385 = vrot.slane %v316, 1
        %v386 = vsel %vm376, %v383, %v385
        %v387 = vrot.slane %v317, 1
        %v388 = vrot.slane %v318, 1
        %v389 = vsel %vm376, %v387, %v388
        %v390 = vrot.slane %v319, 1
        %v391 = vsel %vm376, %v388, %v390
        %v392 = vrot.slane %v320, 1
        %v393 = vrot.slane %v321, 1
        %v394 = vsel %vm376, %v392, %v393
        %v395 = vrot.slane %v322, 1
        %v396 = vsel %vm376, %v393, %v395
        %v397 = vrot.slane %v323, 1
        %v398 = vrot.slane %v324, 1
        %v399 = vsel %vm376, %v397, %v398
        %v400 = vrot.slane %v325, 1
        %v401 = vsel %vm376, %v398, %v400
        %v402 = vrot.slane %v326, 1
        %v403 = vrot.slane %v327, 1
        %v404 = vsel %vm376, %v402, %v403
        %v405 = vrot.slane %v328, 1
        %v406 = vsel %vm376, %v403, %v405
        %v407 = vrot.slane %v329, 1
        %v408 = vrot.slane %v330, 1
        %v409 = vsel %vm376, %v407, %v408
        %v410 = vrot.slane %v331, 1
        %v411 = vsel %vm376, %v408, %v410
        %v412 = vrot.slane %v332, 1
        %v413 = vrot.slane %v333, 1
        %v414 = vsel %vm376, %v412, %v413
        %v415 = vrot.slane %v334, 1
        %v416 = vsel %vm376, %v413, %v415
        %417 = vrot.lane.b32.xlu0 %v379, 4
        %v418 = vpop.permute.xlu0 %417
        %419 = vrot.lane.b32.xlu0 %v381, 4
        %v420 = vpop.permute.xlu0 %419
        %421 = vrot.lane.b32.xlu0 %v384, 4
        %v422 = vpop.permute.xlu0 %421
        %423 = vrot.lane.b32.xlu0 %v386, 4
        %v424 = vpop.permute.xlu0 %423
        %425 = vrot.lane.b32.xlu0 %v389, 4
        %v426 = vpop.permute.xlu0 %425
        %427 = vrot.lane.b32.xlu0 %v391, 4
        %v428 = vpop.permute.xlu0 %427
        %429 = vrot.lane.b32.xlu0 %v394, 4
        %v430 = vpop.permute.xlu0 %429
        %431 = vrot.lane.b32.xlu0 %v396, 4
        %v432 = vpop.permute.xlu0 %431
        %433 = vrot.lane.b32.xlu0 %v399, 4
        %v434 = vpop.permute.xlu0 %433
        %435 = vrot.lane.b32.xlu0 %v401, 4
        %v436 = vpop.permute.xlu0 %435
        %437 = vrot.lane.b32.xlu0 %v404, 4
        %v438 = vpop.permute.xlu0 %437
        %439 = vrot.lane.b32.xlu0 %v406, 4
        %v440 = vpop.permute.xlu0 %439
        %441 = vrot.lane.b32.xlu0 %v409, 4
        %v442 = vpop.permute.xlu0 %441
        %443 = vrot.lane.b32.xlu0 %v411, 4
        %v444 = vpop.permute.xlu0 %443
        %445 = vrot.lane.b32.xlu0 %v414, 4
        %v446 = vpop.permute.xlu0 %445
        %447 = vrot.lane.b32.xlu0 %v416, 4
        %v448 = vpop.permute.xlu0 %447
        %vm465 = vcmask 64544
        %466 = vst.msk [vmem:[#allocation3] sm:$0xff] %vm465, %v418
        %467 = vst.msk [vmem:[#allocation3 + $0x8] sm:$0xff] %vm465, %v420
        %468 = vst.msk [vmem:[#allocation3 + $0x10] sm:$0xff] %vm465, %v422
        %469 = vst.msk [vmem:[#allocation3 + $0x18] sm:$0xff] %vm465, %v424
        %470 = vst.msk [vmem:[#allocation3 + $0x20] sm:$0xff] %vm465, %v426
        %471 = vst.msk [vmem:[#allocation3 + $0x28] sm:$0xff] %vm465, %v428
        %472 = vst.msk [vmem:[#allocation3 + $0x30] sm:$0xff] %vm465, %v430
        %473 = vst.msk [vmem:[#allocation3 + $0x38] sm:$0xff] %vm465, %v432
        %474 = vst.msk [vmem:[#allocation3 + $0x40] sm:$0xff] %vm465, %v434
        %475 = vst.msk [vmem:[#allocation3 + $0x48] sm:$0xff] %vm465, %v436
        %476 = vst.msk [vmem:[#allocation3 + $0x50] sm:$0xff] %vm465, %v438
        %477 = vst.msk [vmem:[#allocation3 + $0x58] sm:$0xff] %vm465, %v440
        %478 = vst.msk [vmem:[#allocation3 + $0x60] sm:$0xff] %vm465, %v442
        %479 = vst.msk [vmem:[#allocation3 + $0x68] sm:$0xff] %vm465, %v444
        %480 = vst.msk [vmem:[#allocation3 + $0x70] sm:$0xff] %vm465, %v446
        %481 = vst.msk [vmem:[#allocation3 + $0x78] sm:$0xff] %vm465, %v448
        %vm482 = vcmask 1045504
        %v483 = vrot.slane %v311, 2
        %v484 = vrot.slane %v312, 2
        %v485 = vsel %vm482, %v483, %v484
        %v486 = vrot.slane %v313, 2
        %v487 = vsel %vm482, %v484, %v486
        %v488 = vrot.slane %v314, 2
        %v489 = vrot.slane %v315, 2
        %v490 = vsel %vm482, %v488, %v489
        %v491 = vrot.slane %v316, 2
        %v492 = vsel %vm482, %v489, %v491
        %v493 = vrot.slane %v317, 2
        %v494 = vrot.slane %v318, 2
        %v495 = vsel %vm482, %v493, %v494
        %v496 = vrot.slane %v319, 2
        %v497 = vsel %vm482, %v494, %v496
        %v498 = vrot.slane %v320, 2
        %v499 = vrot.slane %v321, 2
        %v500 = vsel %vm482, %v498, %v499
        %v501 = vrot.slane %v322, 2
        %v502 = vsel %vm482, %v499, %v501
        %v503 = vrot.slane %v323, 2
        %v504 = vrot.slane %v324, 2
        %v505 = vsel %vm482, %v503, %v504
        %v506 = vrot.slane %v325, 2
        %v507 = vsel %vm482, %v504, %v506
        %v508 = vrot.slane %v326, 2
        %v509 = vrot.slane %v327, 2
        %v510 = vsel %vm482, %v508, %v509
        %v511 = vrot.slane %v328, 2
        %v512 = vsel %vm482, %v509, %v511
        %v513 = vrot.slane %v329, 2
        %v514 = vrot.slane %v330, 2
        %v515 = vsel %vm482, %v513, %v514
        %v516 = vrot.slane %v331, 2
        %v517 = vsel %vm482, %v514, %v516
        %v518 = vrot.slane %v332, 2
        %v519 = vrot.slane %v333, 2
        %v520 = vsel %vm482, %v518, %v519
        %v521 = vrot.slane %v334, 2
        %v522 = vsel %vm482, %v519, %v521
        %523 = vrot.lane.b32.xlu0 %v485, 8
        %v524 = vpop.permute.xlu0 %523
        %525 = vrot.lane.b32.xlu0 %v487, 8
        %v526 = vpop.permute.xlu0 %525
        %527 = vrot.lane.b32.xlu0 %v490, 8
        %v528 = vpop.permute.xlu0 %527
        %529 = vrot.lane.b32.xlu0 %v492, 8
        %v530 = vpop.permute.xlu0 %529
        %531 = vrot.lane.b32.xlu0 %v495, 8
        %v532 = vpop.permute.xlu0 %531
        %533 = vrot.lane.b32.xlu0 %v497, 8
        %v534 = vpop.permute.xlu0 %533
        %535 = vrot.lane.b32.xlu0 %v500, 8
        %v536 = vpop.permute.xlu0 %535
        %537 = vrot.lane.b32.xlu0 %v502, 8
        %v538 = vpop.permute.xlu0 %537
        %539 = vrot.lane.b32.xlu0 %v505, 8
        %v540 = vpop.permute.xlu0 %539
        %541 = vrot.lane.b32.xlu0 %v507, 8
        %v542 = vpop.permute.xlu0 %541
        %543 = vrot.lane.b32.xlu0 %v510, 8
        %v544 = vpop.permute.xlu0 %543
        %545 = vrot.lane.b32.xlu0 %v512, 8
        %v546 = vpop.permute.xlu0 %545
        %547 = vrot.lane.b32.xlu0 %v515, 8
        %v548 = vpop.permute.xlu0 %547
        %549 = vrot.lane.b32.xlu0 %v517, 8
        %v550 = vpop.permute.xlu0 %549
        %551 = vrot.lane.b32.xlu0 %v520, 8
        %v552 = vpop.permute.xlu0 %551
        %553 = vrot.lane.b32.xlu0 %v522, 8
        %v554 = vpop.permute.xlu0 %553
        %vm571 = vcmask 97344
        %572 = vst.msk [vmem:[#allocation3] sm:$0xff] %vm571, %v524
        %573 = vst.msk [vmem:[#allocation3 + $0x8] sm:$0xff] %vm571, %v526
        %574 = vst.msk [vmem:[#allocation3 + $0x10] sm:$0xff] %vm571, %v528
        %575 = vst.msk [vmem:[#allocation3 + $0x18] sm:$0xff] %vm571, %v530
        %576 = vst.msk [vmem:[#allocation3 + $0x20] sm:$0xff] %vm571, %v532
        %577 = vst.msk [vmem:[#allocation3 + $0x28] sm:$0xff] %vm571, %v534
        %578 = vst.msk [vmem:[#allocation3 + $0x30] sm:$0xff] %vm571, %v536
        %579 = vst.msk [vmem:[#allocation3 + $0x38] sm:$0xff] %vm571, %v538
        %580 = vst.msk [vmem:[#allocation3 + $0x40] sm:$0xff] %vm571, %v540
        %581 = vst.msk [vmem:[#allocation3 + $0x48] sm:$0xff] %vm571, %v542
        %582 = vst.msk [vmem:[#allocation3 + $0x50] sm:$0xff] %vm571, %v544
        %583 = vst.msk [vmem:[#allocation3 + $0x58] sm:$0xff] %vm571, %v546
        %584 = vst.msk [vmem:[#allocation3 + $0x60] sm:$0xff] %vm571, %v548
        %585 = vst.msk [vmem:[#allocation3 + $0x68] sm:$0xff] %vm571, %v550
        %586 = vst.msk [vmem:[#allocation3 + $0x70] sm:$0xff] %vm571, %v552
        %587 = vst.msk [vmem:[#allocation3 + $0x78] sm:$0xff] %vm571, %v554
        %s588 = sadd.s32 %s308, 1
        %s589 = smul.u32 %s588, 24
        %s590 = scalar_lea.vmem [#allocation2], %s589
        %v591 = vld [vmem:[%s590] sm:$0xff]
        %v592 = vld [vmem:[%s590 + $0x8] sm:$0xff]
        %v593 = vld [vmem:[%s590 + $0x10] sm:$0x3]
        %v594 = vld [vmem:[%s590 + $0x18] sm:$0xff]
        %v595 = vld [vmem:[%s590 + $0x20] sm:$0xff]
        %v596 = vld [vmem:[%s590 + $0x28] sm:$0x3]
        %v597 = vld [vmem:[%s590 + $0x30] sm:$0xff]
        %v598 = vld [vmem:[%s590 + $0x38] sm:$0xff]
        %v599 = vld [vmem:[%s590 + $0x40] sm:$0x3]
        %v600 = vld [vmem:[%s590 + $0x48] sm:$0xff]
        %v601 = vld [vmem:[%s590 + $0x50] sm:$0xff]
        %v602 = vld [vmem:[%s590 + $0x58] sm:$0x3]
        %v603 = vld [vmem:[%s590 + $0x60] sm:$0xff]
        %v604 = vld [vmem:[%s590 + $0x68] sm:$0xff]
        %v605 = vld [vmem:[%s590 + $0x70] sm:$0x3]
        %v606 = vld [vmem:[%s590 + $0x78] sm:$0xff]
        %v607 = vld [vmem:[%s590 + $0x80] sm:$0xff]
        %v608 = vld [vmem:[%s590 + $0x88] sm:$0x3]
        %v609 = vld [vmem:[%s590 + $0x90] sm:$0xff]
        %v610 = vld [vmem:[%s590 + $0x98] sm:$0xff]
        %v611 = vld [vmem:[%s590 + $0xa0] sm:$0x3]
        %v612 = vld [vmem:[%s590 + $0xa8] sm:$0xff]
        %v613 = vld [vmem:[%s590 + $0xb0] sm:$0xff]
        %v614 = vld [vmem:[%s590 + $0xb8] sm:$0x3]
        %631 = vrot.lane.b32.xlu0 %v591, 12
        %v632 = vpop.permute.xlu0 %631
        %633 = vrot.lane.b32.xlu0 %v592, 12
        %v634 = vpop.permute.xlu0 %633
        %635 = vrot.lane.b32.xlu0 %v594, 12
        %v636 = vpop.permute.xlu0 %635
        %637 = vrot.lane.b32.xlu0 %v595, 12
        %v638 = vpop.permute.xlu0 %637
        %639 = vrot.lane.b32.xlu0 %v597, 12
        %v640 = vpop.permute.xlu0 %639
        %641 = vrot.lane.b32.xlu0 %v598, 12
        %v642 = vpop.permute.xlu0 %641
        %643 = vrot.lane.b32.xlu0 %v600, 12
        %v644 = vpop.permute.xlu0 %643
        %645 = vrot.lane.b32.xlu0 %v601, 12
        %v646 = vpop.permute.xlu0 %645
        %647 = vrot.lane.b32.xlu0 %v603, 12
        %v648 = vpop.permute.xlu0 %647
        %649 = vrot.lane.b32.xlu0 %v604, 12
        %v650 = vpop.permute.xlu0 %649
        %651 = vrot.lane.b32.xlu0 %v606, 12
        %v652 = vpop.permute.xlu0 %651
        %653 = vrot.lane.b32.xlu0 %v607, 12
        %v654 = vpop.permute.xlu0 %653
        %655 = vrot.lane.b32.xlu0 %v609, 12
        %v656 = vpop.permute.xlu0 %655
        %657 = vrot.lane.b32.xlu0 %v610, 12
        %v658 = vpop.permute.xlu0 %657
        %659 = vrot.lane.b32.xlu0 %v612, 12
        %v660 = vpop.permute.xlu0 %659
        %661 = vrot.lane.b32.xlu0 %v613, 12
        %v662 = vpop.permute.xlu0 %661
        %vm679 = vcmask 130144
        %680 = vst.msk [vmem:[#allocation3] sm:$0xff] %vm679, %v632
        %681 = vst.msk [vmem:[#allocation3 + $0x8] sm:$0xff] %vm679, %v634
        %682 = vst.msk [vmem:[#allocation3 + $0x10] sm:$0xff] %vm679, %v636
        %683 = vst.msk [vmem:[#allocation3 + $0x18] sm:$0xff] %vm679, %v638
        %684 = vst.msk [vmem:[#allocation3 + $0x20] sm:$0xff] %vm679, %v640
        %685 = vst.msk [vmem:[#allocation3 + $0x28] sm:$0xff] %vm679, %v642
        %686 = vst.msk [vmem:[#allocation3 + $0x30] sm:$0xff] %vm679, %v644
        %687 = vst.msk [vmem:[#allocation3 + $0x38] sm:$0xff] %vm679, %v646
        %688 = vst.msk [vmem:[#allocation3 + $0x40] sm:$0xff] %vm679, %v648
        %689 = vst.msk [vmem:[#allocation3 + $0x48] sm:$0xff] %vm679, %v650
        %690 = vst.msk [vmem:[#allocation3 + $0x50] sm:$0xff] %vm679, %v652
        %691 = vst.msk [vmem:[#allocation3 + $0x58] sm:$0xff] %vm679, %v654
        %692 = vst.msk [vmem:[#allocation3 + $0x60] sm:$0xff] %vm679, %v656
        %693 = vst.msk [vmem:[#allocation3 + $0x68] sm:$0xff] %vm679, %v658
        %694 = vst.msk [vmem:[#allocation3 + $0x70] sm:$0xff] %vm679, %v660
        %695 = vst.msk [vmem:[#allocation3 + $0x78] sm:$0xff] %vm679, %v662
        %v704 = vrot.slane %v591, 1
        %v705 = vrot.slane %v592, 1
        %v706 = vsel %vm376, %v704, %v705
        %v707 = vrot.slane %v593, 1
        %v708 = vsel %vm376, %v705, %v707
        %v709 = vrot.slane %v594, 1
        %v710 = vrot.slane %v595, 1
        %v711 = vsel %vm376, %v709, %v710
        %v712 = vrot.slane %v596, 1
        %v713 = vsel %vm376, %v710, %v712
        %v714 = vrot.slane %v597, 1
        %v715 = vrot.slane %v598, 1
        %v716 = vsel %vm376, %v714, %v715
        %v717 = vrot.slane %v599, 1
        %v718 = vsel %vm376, %v715, %v717
        %v719 = vrot.slane %v600, 1
        %v720 = vrot.slane %v601, 1
        %v721 = vsel %vm376, %v719, %v720
        %v722 = vrot.slane %v602, 1
        %v723 = vsel %vm376, %v720, %v722
        %v724 = vrot.slane %v603, 1
        %v725 = vrot.slane %v604, 1
        %v726 = vsel %vm376, %v724, %v725
        %v727 = vrot.slane %v605, 1
        %v728 = vsel %vm376, %v725, %v727
        %v729 = vrot.slane %v606, 1
        %v730 = vrot.slane %v607, 1
        %v731 = vsel %vm376, %v729, %v730
        %v732 = vrot.slane %v608, 1
        %v733 = vsel %vm376, %v730, %v732
        %v734 = vrot.slane %v609, 1
        %v735 = vrot.slane %v610, 1
        %v736 = vsel %vm376, %v734, %v735
        %v737 = vrot.slane %v611, 1
        %v738 = vsel %vm376, %v735, %v737
        %v739 = vrot.slane %v612, 1
        %v740 = vrot.slane %v613, 1
        %v741 = vsel %vm376, %v739, %v740
        %v742 = vrot.slane %v614, 1
        %v743 = vsel %vm376, %v740, %v742
        %744 = vrot.lane.b32.xlu0 %v706, 16
        %v745 = vpop.permute.xlu0 %744
        %746 = vrot.lane.b32.xlu0 %v708, 16
        %v747 = vpop.permute.xlu0 %746
        %748 = vrot.lane.b32.xlu0 %v711, 16
        %v749 = vpop.permute.xlu0 %748
        %750 = vrot.lane.b32.xlu0 %v713, 16
        %v751 = vpop.permute.xlu0 %750
        %752 = vrot.lane.b32.xlu0 %v716, 16
        %v753 = vpop.permute.xlu0 %752
        %754 = vrot.lane.b32.xlu0 %v718, 16
        %v755 = vpop.permute.xlu0 %754
        %756 = vrot.lane.b32.xlu0 %v721, 16
        %v757 = vpop.permute.xlu0 %756
        %758 = vrot.lane.b32.xlu0 %v723, 16
        %v759 = vpop.permute.xlu0 %758
        %760 = vrot.lane.b32.xlu0 %v726, 16
        %v761 = vpop.permute.xlu0 %760
        %762 = vrot.lane.b32.xlu0 %v728, 16
        %v763 = vpop.permute.xlu0 %762
        %764 = vrot.lane.b32.xlu0 %v731, 16
        %v765 = vpop.permute.xlu0 %764
        %766 = vrot.lane.b32.xlu0 %v733, 16
        %v767 = vpop.permute.xlu0 %766
        %768 = vrot.lane.b32.xlu0 %v736, 16
        %v769 = vpop.permute.xlu0 %768
        %770 = vrot.lane.b32.xlu0 %v738, 16
        %v771 = vpop.permute.xlu0 %770
        %772 = vrot.lane.b32.xlu0 %v741, 16
        %v773 = vpop.permute.xlu0 %772
        %774 = vrot.lane.b32.xlu0 %v743, 16
        %v775 = vpop.permute.xlu0 %774
        %vm792 = vcmask 162944
        %793 = vst.msk [vmem:[#allocation3] sm:$0xff] %vm792, %v745
        %794 = vst.msk [vmem:[#allocation3 + $0x8] sm:$0xff] %vm792, %v747
        %795 = vst.msk [vmem:[#allocation3 + $0x10] sm:$0xff] %vm792, %v749
        %796 = vst.msk [vmem:[#allocation3 + $0x18] sm:$0xff] %vm792, %v751
        %797 = vst.msk [vmem:[#allocation3 + $0x20] sm:$0xff] %vm792, %v753
        %798 = vst.msk [vmem:[#allocation3 + $0x28] sm:$0xff] %vm792, %v755
        %799 = vst.msk [vmem:[#allocation3 + $0x30] sm:$0xff] %vm792, %v757
        %800 = vst.msk [vmem:[#allocation3 + $0x38] sm:$0xff] %vm792, %v759
        %801 = vst.msk [vmem:[#allocation3 + $0x40] sm:$0xff] %vm792, %v761
        %802 = vst.msk [vmem:[#allocation3 + $0x48] sm:$0xff] %vm792, %v763
        %803 = vst.msk [vmem:[#allocation3 + $0x50] sm:$0xff] %vm792, %v765
        %804 = vst.msk [vmem:[#allocation3 + $0x58] sm:$0xff] %vm792, %v767
        %805 = vst.msk [vmem:[#allocation3 + $0x60] sm:$0xff] %vm792, %v769
        %806 = vst.msk [vmem:[#allocation3 + $0x68] sm:$0xff] %vm792, %v771
        %807 = vst.msk [vmem:[#allocation3 + $0x70] sm:$0xff] %vm792, %v773
        %808 = vst.msk [vmem:[#allocation3 + $0x78] sm:$0xff] %vm792, %v775
        %v809 = vrot.slane %v591, 2
        %v810 = vrot.slane %v592, 2
        %v811 = vsel %vm482, %v809, %v810
        %v812 = vrot.slane %v593, 2
        %v813 = vsel %vm482, %v810, %v812
        %v814 = vrot.slane %v594, 2
        %v815 = vrot.slane %v595, 2
        %v816 = vsel %vm482, %v814, %v815
        %v817 = vrot.slane %v596, 2
        %v818 = vsel %vm482, %v815, %v817
        %v819 = vrot.slane %v597, 2
        %v820 = vrot.slane %v598, 2
        %v821 = vsel %vm482, %v819, %v820
        %v822 = vrot.slane %v599, 2
        %v823 = vsel %vm482, %v820, %v822
        %v824 = vrot.slane %v600, 2
        %v825 = vrot.slane %v601, 2
        %v826 = vsel %vm482, %v824, %v825
        %v827 = vrot.slane %v602, 2
        %v828 = vsel %vm482, %v825, %v827
        %v829 = vrot.slane %v603, 2
        %v830 = vrot.slane %v604, 2
        %v831 = vsel %vm482, %v829, %v830
        %v832 = vrot.slane %v605, 2
        %v833 = vsel %vm482, %v830, %v832
        %v834 = vrot.slane %v606, 2
        %v835 = vrot.slane %v607, 2
        %v836 = vsel %vm482, %v834, %v835
        %v837 = vrot.slane %v608, 2
        %v838 = vsel %vm482, %v835, %v837
        %v839 = vrot.slane %v609, 2
        %v840 = vrot.slane %v610, 2
        %v841 = vsel %vm482, %v839, %v840
        %v842 = vrot.slane %v611, 2
        %v843 = vsel %vm482, %v840, %v842
        %v844 = vrot.slane %v612, 2
        %v845 = vrot.slane %v613, 2
        %v846 = vsel %vm482, %v844, %v845
        %v847 = vrot.slane %v614, 2
        %v848 = vsel %vm482, %v845, %v847
        %849 = vrot.lane.b32.xlu0 %v811, 20
        %v850 = vpop.permute.xlu0 %849
        %851 = vrot.lane.b32.xlu0 %v813, 20
        %v852 = vpop.permute.xlu0 %851
        %853 = vrot.lane.b32.xlu0 %v816, 20
        %v854 = vpop.permute.xlu0 %853
        %855 = vrot.lane.b32.xlu0 %v818, 20
        %v856 = vpop.permute.xlu0 %855
        %857 = vrot.lane.b32.xlu0 %v821, 20
        %v858 = vpop.permute.xlu0 %857
        %859 = vrot.lane.b32.xlu0 %v823, 20
        %v860 = vpop.permute.xlu0 %859
        %861 = vrot.lane.b32.xlu0 %v826, 20
        %v862 = vpop.permute.xlu0 %861
        %863 = vrot.lane.b32.xlu0 %v828, 20
        %v864 = vpop.permute.xlu0 %863
        %865 = vrot.lane.b32.xlu0 %v831, 20
        %v866 = vpop.permute.xlu0 %865
        %867 = vrot.lane.b32.xlu0 %v833, 20
        %v868 = vpop.permute.xlu0 %867
        %869 = vrot.lane.b32.xlu0 %v836, 20
        %v870 = vpop.permute.xlu0 %869
        %871 = vrot.lane.b32.xlu0 %v838, 20
        %v872 = vpop.permute.xlu0 %871
        %873 = vrot.lane.b32.xlu0 %v841, 20
        %v874 = vpop.permute.xlu0 %873
        %875 = vrot.lane.b32.xlu0 %v843, 20
        %v876 = vpop.permute.xlu0 %875
        %877 = vrot.lane.b32.xlu0 %v846, 20
        %v878 = vpop.permute.xlu0 %877
        %879 = vrot.lane.b32.xlu0 %v848, 20
        %v880 = vpop.permute.xlu0 %879
        %vm897 = vcmask 195744
        %898 = vst.msk [vmem:[#allocation3] sm:$0xff] %vm897, %v850
        %899 = vst.msk [vmem:[#allocation3 + $0x8] sm:$0xff] %vm897, %v852
        %900 = vst.msk [vmem:[#allocation3 + $0x10] sm:$0xff] %vm897, %v854
        %901 = vst.msk [vmem:[#allocation3 + $0x18] sm:$0xff] %vm897, %v856
        %902 = vst.msk [vmem:[#allocation3 + $0x20] sm:$0xff] %vm897, %v858
        %903 = vst.msk [vmem:[#allocation3 + $0x28] sm:$0xff] %vm897, %v860
        %904 = vst.msk [vmem:[#allocation3 + $0x30] sm:$0xff] %vm897, %v862
        %905 = vst.msk [vmem:[#allocation3 + $0x38] sm:$0xff] %vm897, %v864
        %906 = vst.msk [vmem:[#allocation3 + $0x40] sm:$0xff] %vm897, %v866
        %907 = vst.msk [vmem:[#allocation3 + $0x48] sm:$0xff] %vm897, %v868
        %908 = vst.msk [vmem:[#allocation3 + $0x50] sm:$0xff] %vm897, %v870
        %909 = vst.msk [vmem:[#allocation3 + $0x58] sm:$0xff] %vm897, %v872
        %910 = vst.msk [vmem:[#allocation3 + $0x60] sm:$0xff] %vm897, %v874
        %911 = vst.msk [vmem:[#allocation3 + $0x68] sm:$0xff] %vm897, %v876
        %912 = vst.msk [vmem:[#allocation3 + $0x70] sm:$0xff] %vm897, %v878
        %913 = vst.msk [vmem:[#allocation3 + $0x78] sm:$0xff] %vm897, %v880
        %s914 = sadd.s32 %s308, 2
        %s915 = smul.u32 %s914, 24
        %s916 = scalar_lea.vmem [#allocation2], %s915
        %v917 = vld [vmem:[%s916] sm:$0xff]
        %v918 = vld [vmem:[%s916 + $0x8] sm:$0xff]
        %v919 = vld [vmem:[%s916 + $0x10] sm:$0x3]
        %v920 = vld [vmem:[%s916 + $0x18] sm:$0xff]
        %v921 = vld [vmem:[%s916 + $0x20] sm:$0xff]
        %v922 = vld [vmem:[%s916 + $0x28] sm:$0x3]
        %v923 = vld [vmem:[%s916 + $0x30] sm:$0xff]
        %v924 = vld [vmem:[%s916 + $0x38] sm:$0xff]
        %v925 = vld [vmem:[%s916 + $0x40] sm:$0x3]
        %v926 = vld [vmem:[%s916 + $0x48] sm:$0xff]
        %v927 = vld [vmem:[%s916 + $0x50] sm:$0xff]
        %v928 = vld [vmem:[%s916 + $0x58] sm:$0x3]
        %v929 = vld [vmem:[%s916 + $0x60] sm:$0xff]
        %v930 = vld [vmem:[%s916 + $0x68] sm:$0xff]
        %v931 = vld [vmem:[%s916 + $0x70] sm:$0x3]
        %v932 = vld [vmem:[%s916 + $0x78] sm:$0xff]
        %v933 = vld [vmem:[%s916 + $0x80] sm:$0xff]
        %v934 = vld [vmem:[%s916 + $0x88] sm:$0x3]
        %v935 = vld [vmem:[%s916 + $0x90] sm:$0xff]
        %v936 = vld [vmem:[%s916 + $0x98] sm:$0xff]
        %v937 = vld [vmem:[%s916 + $0xa0] sm:$0x3]
        %v938 = vld [vmem:[%s916 + $0xa8] sm:$0xff]
        %v939 = vld [vmem:[%s916 + $0xb0] sm:$0xff]
        %v940 = vld [vmem:[%s916 + $0xb8] sm:$0x3]
        %957 = vrot.lane.b32.xlu0 %v917, 24
        %v958 = vpop.permute.xlu0 %957
        %959 = vrot.lane.b32.xlu0 %v918, 24
        %v960 = vpop.permute.xlu0 %959
        %961 = vrot.lane.b32.xlu0 %v920, 24
        %v962 = vpop.permute.xlu0 %961
        %963 = vrot.lane.b32.xlu0 %v921, 24
        %v964 = vpop.permute.xlu0 %963
        %965 = vrot.lane.b32.xlu0 %v923, 24
        %v966 = vpop.permute.xlu0 %965
        %967 = vrot.lane.b32.xlu0 %v924, 24
        %v968 = vpop.permute.xlu0 %967
        %969 = vrot.lane.b32.xlu0 %v926, 24
        %v970 = vpop.permute.xlu0 %969
        %971 = vrot.lane.b32.xlu0 %v927, 24
        %v972 = vpop.permute.xlu0 %971
        %973 = vrot.lane.b32.xlu0 %v929, 24
        %v974 = vpop.permute.xlu0 %973
        %975 = vrot.lane.b32.xlu0 %v930, 24
        %v976 = vpop.permute.xlu0 %975
        %977 = vrot.lane.b32.xlu0 %v932, 24
        %v978 = vpop.permute.xlu0 %977
        %979 = vrot.lane.b32.xlu0 %v933, 24
        %v980 = vpop.permute.xlu0 %979
        %981 = vrot.lane.b32.xlu0 %v935, 24
        %v982 = vpop.permute.xlu0 %981
        %983 = vrot.lane.b32.xlu0 %v936, 24
        %v984 = vpop.permute.xlu0 %983
        %985 = vrot.lane.b32.xlu0 %v938, 24
        %v986 = vpop.permute.xlu0 %985
        %987 = vrot.lane.b32.xlu0 %v939, 24
        %v988 = vpop.permute.xlu0 %987
        %vm1005 = vcmask 228544
        %1006 = vst.msk [vmem:[#allocation3] sm:$0xff] %vm1005, %v958
        %1007 = vst.msk [vmem:[#allocation3 + $0x8] sm:$0xff] %vm1005, %v960
        %1008 = vst.msk [vmem:[#allocation3 + $0x10] sm:$0xff] %vm1005, %v962
        %1009 = vst.msk [vmem:[#allocation3 + $0x18] sm:$0xff] %vm1005, %v964
        %1010 = vst.msk [vmem:[#allocation3 + $0x20] sm:$0xff] %vm1005, %v966
        %1011 = vst.msk [vmem:[#allocation3 + $0x28] sm:$0xff] %vm1005, %v968
        %1012 = vst.msk [vmem:[#allocation3 + $0x30] sm:$0xff] %vm1005, %v970
        %1013 = vst.msk [vmem:[#allocation3 + $0x38] sm:$0xff] %vm1005, %v972
        %1014 = vst.msk [vmem:[#allocation3 + $0x40] sm:$0xff] %vm1005, %v974
        %1015 = vst.msk [vmem:[#allocation3 + $0x48] sm:$0xff] %vm1005, %v976
        %1016 = vst.msk [vmem:[#allocation3 + $0x50] sm:$0xff] %vm1005, %v978
        %1017 = vst.msk [vmem:[#allocation3 + $0x58] sm:$0xff] %vm1005, %v980
        %1018 = vst.msk [vmem:[#allocation3 + $0x60] sm:$0xff] %vm1005, %v982
        %1019 = vst.msk [vmem:[#allocation3 + $0x68] sm:$0xff] %vm1005, %v984
        %1020 = vst.msk [vmem:[#allocation3 + $0x70] sm:$0xff] %vm1005, %v986
        %1021 = vst.msk [vmem:[#allocation3 + $0x78] sm:$0xff] %vm1005, %v988
        %v1030 = vrot.slane %v917, 1
        %v1031 = vrot.slane %v918, 1
        %v1032 = vsel %vm376, %v1030, %v1031
        %v1033 = vrot.slane %v919, 1
        %v1034 = vsel %vm376, %v1031, %v1033
        %v1035 = vrot.slane %v920, 1
        %v1036 = vrot.slane %v921, 1
        %v1037 = vsel %vm376, %v1035, %v1036
        %v1038 = vrot.slane %v922, 1
        %v1039 = vsel %vm376, %v1036, %v1038
        %v1040 = vrot.slane %v923, 1
        %v1041 = vrot.slane %v924, 1
        %v1042 = vsel %vm376, %v1040, %v1041
        %v1043 = vrot.slane %v925, 1
        %v1044 = vsel %vm376, %v1041, %v1043
        %v1045 = vrot.slane %v926, 1
        %v1046 = vrot.slane %v927, 1
        %v1047 = vsel %vm376, %v1045, %v1046
        %v1048 = vrot.slane %v928, 1
        %v1049 = vsel %vm376, %v1046, %v1048
        %v1050 = vrot.slane %v929, 1
        %v1051 = vrot.slane %v930, 1
        %v1052 = vsel %vm376, %v1050, %v1051
        %v1053 = vrot.slane %v931, 1
        %v1054 = vsel %vm376, %v1051, %v1053
        %v1055 = vrot.slane %v932, 1
        %v1056 = vrot.slane %v933, 1
        %v1057 = vsel %vm376, %v1055, %v1056
        %v1058 = vrot.slane %v934, 1
        %v1059 = vsel %vm376, %v1056, %v1058
        %v1060 = vrot.slane %v935, 1
        %v1061 = vrot.slane %v936, 1
        %v1062 = vsel %vm376, %v1060, %v1061
        %v1063 = vrot.slane %v937, 1
        %v1064 = vsel %vm376, %v1061, %v1063
        %v1065 = vrot.slane %v938, 1
        %v1066 = vrot.slane %v939, 1
        %v1067 = vsel %vm376, %v1065, %v1066
        %v1068 = vrot.slane %v940, 1
        %v1069 = vsel %vm376, %v1066, %v1068
        %1070 = vrot.lane.b32.xlu0 %v1032, 28
        %v1071 = vpop.permute.xlu0 %1070
        %1072 = vrot.lane.b32.xlu0 %v1034, 28
        %v1073 = vpop.permute.xlu0 %1072
        %1074 = vrot.lane.b32.xlu0 %v1037, 28
        %v1075 = vpop.permute.xlu0 %1074
        %1076 = vrot.lane.b32.xlu0 %v1039, 28
        %v1077 = vpop.permute.xlu0 %1076
        %1078 = vrot.lane.b32.xlu0 %v1042, 28
        %v1079 = vpop.permute.xlu0 %1078
        %1080 = vrot.lane.b32.xlu0 %v1044, 28
        %v1081 = vpop.permute.xlu0 %1080
        %1082 = vrot.lane.b32.xlu0 %v1047, 28
        %v1083 = vpop.permute.xlu0 %1082
        %1084 = vrot.lane.b32.xlu0 %v1049, 28
        %v1085 = vpop.permute.xlu0 %1084
        %1086 = vrot.lane.b32.xlu0 %v1052, 28
        %v1087 = vpop.permute.xlu0 %1086
        %1088 = vrot.lane.b32.xlu0 %v1054, 28
        %v1089 = vpop.permute.xlu0 %1088
        %1090 = vrot.lane.b32.xlu0 %v1057, 28
        %v1091 = vpop.permute.xlu0 %1090
        %1092 = vrot.lane.b32.xlu0 %v1059, 28
        %v1093 = vpop.permute.xlu0 %1092
        %1094 = vrot.lane.b32.xlu0 %v1062, 28
        %v1095 = vpop.permute.xlu0 %1094
        %1096 = vrot.lane.b32.xlu0 %v1064, 28
        %v1097 = vpop.permute.xlu0 %1096
        %1098 = vrot.lane.b32.xlu0 %v1067, 28
        %v1099 = vpop.permute.xlu0 %1098
        %1100 = vrot.lane.b32.xlu0 %v1069, 28
        %v1101 = vpop.permute.xlu0 %1100
        %vm1118 = vcmask 261344
        %1119 = vst.msk [vmem:[#allocation3] sm:$0xff] %vm1118, %v1071
        %1120 = vst.msk [vmem:[#allocation3 + $0x8] sm:$0xff] %vm1118, %v1073
        %1121 = vst.msk [vmem:[#allocation3 + $0x10] sm:$0xff] %vm1118, %v1075
        %1122 = vst.msk [vmem:[#allocation3 + $0x18] sm:$0xff] %vm1118, %v1077
        %1123 = vst.msk [vmem:[#allocation3 + $0x20] sm:$0xff] %vm1118, %v1079
        %1124 = vst.msk [vmem:[#allocation3 + $0x28] sm:$0xff] %vm1118, %v1081
        %1125 = vst.msk [vmem:[#allocation3 + $0x30] sm:$0xff] %vm1118, %v1083
        %1126 = vst.msk [vmem:[#allocation3 + $0x38] sm:$0xff] %vm1118, %v1085
        %1127 = vst.msk [vmem:[#allocation3 + $0x40] sm:$0xff] %vm1118, %v1087
        %1128 = vst.msk [vmem:[#allocation3 + $0x48] sm:$0xff] %vm1118, %v1089
        %1129 = vst.msk [vmem:[#allocation3 + $0x50] sm:$0xff] %vm1118, %v1091
        %1130 = vst.msk [vmem:[#allocation3 + $0x58] sm:$0xff] %vm1118, %v1093
        %1131 = vst.msk [vmem:[#allocation3 + $0x60] sm:$0xff] %vm1118, %v1095
        %1132 = vst.msk [vmem:[#allocation3 + $0x68] sm:$0xff] %vm1118, %v1097
        %1133 = vst.msk [vmem:[#allocation3 + $0x70] sm:$0xff] %vm1118, %v1099
        %1134 = vst.msk [vmem:[#allocation3 + $0x78] sm:$0xff] %vm1118, %v1101
        %v1135 = vrot.slane %v917, 2
        %v1136 = vrot.slane %v918, 2
        %v1137 = vsel %vm482, %v1135, %v1136
        %v1138 = vrot.slane %v919, 2
        %v1139 = vsel %vm482, %v1136, %v1138
        %v1140 = vrot.slane %v920, 2
        %v1141 = vrot.slane %v921, 2
        %v1142 = vsel %vm482, %v1140, %v1141
        %v1143 = vrot.slane %v922, 2
        %v1144 = vsel %vm482, %v1141, %v1143
        %v1145 = vrot.slane %v923, 2
        %v1146 = vrot.slane %v924, 2
        %v1147 = vsel %vm482, %v1145, %v1146
        %v1148 = vrot.slane %v925, 2
        %v1149 = vsel %vm482, %v1146, %v1148
        %v1150 = vrot.slane %v926, 2
        %v1151 = vrot.slane %v927, 2
        %v1152 = vsel %vm482, %v1150, %v1151
        %v1153 = vrot.slane %v928, 2
        %v1154 = vsel %vm482, %v1151, %v1153
        %v1155 = vrot.slane %v929, 2
        %v1156 = vrot.slane %v930, 2
        %v1157 = vsel %vm482, %v1155, %v1156
        %v1158 = vrot.slane %v931, 2
        %v1159 = vsel %vm482, %v1156, %v1158
        %v1160 = vrot.slane %v932, 2
        %v1161 = vrot.slane %v933, 2
        %v1162 = vsel %vm482, %v1160, %v1161
        %v1163 = vrot.slane %v934, 2
        %v1164 = vsel %vm482, %v1161, %v1163
        %v1165 = vrot.slane %v935, 2
        %v1166 = vrot.slane %v936, 2
        %v1167 = vsel %vm482, %v1165, %v1166
        %v1168 = vrot.slane %v937, 2
        %v1169 = vsel %vm482, %v1166, %v1168
        %v1170 = vrot.slane %v938, 2
        %v1171 = vrot.slane %v939, 2
        %v1172 = vsel %vm482, %v1170, %v1171
        %v1173 = vrot.slane %v940, 2
        %v1174 = vsel %vm482, %v1171, %v1173
        %1175 = vrot.lane.b32.xlu0 %v1137, 32
        %v1176 = vpop.permute.xlu0 %1175
        %1177 = vrot.lane.b32.xlu0 %v1139, 32
        %v1178 = vpop.permute.xlu0 %1177
        %1179 = vrot.lane.b32.xlu0 %v1142, 32
        %v1180 = vpop.permute.xlu0 %1179
        %1181 = vrot.lane.b32.xlu0 %v1144, 32
        %v1182 = vpop.permute.xlu0 %1181
        %1183 = vrot.lane.b32.xlu0 %v1147, 32
        %v1184 = vpop.permute.xlu0 %1183
        %1185 = vrot.lane.b32.xlu0 %v1149, 32
        %v1186 = vpop.permute.xlu0 %1185
        %1187 = vrot.lane.b32.xlu0 %v1152, 32
        %v1188 = vpop.permute.xlu0 %1187
        %1189 = vrot.lane.b32.xlu0 %v1154, 32
        %v1190 = vpop.permute.xlu0 %1189
        %1191 = vrot.lane.b32.xlu0 %v1157, 32
        %v1192 = vpop.permute.xlu0 %1191
        %1193 = vrot.lane.b32.xlu0 %v1159, 32
        %v1194 = vpop.permute.xlu0 %1193
        %1195 = vrot.lane.b32.xlu0 %v1162, 32
        %v1196 = vpop.permute.xlu0 %1195
        %1197 = vrot.lane.b32.xlu0 %v1164, 32
        %v1198 = vpop.permute.xlu0 %1197
        %1199 = vrot.lane.b32.xlu0 %v1167, 32
        %v1200 = vpop.permute.xlu0 %1199
        %1201 = vrot.lane.b32.xlu0 %v1169, 32
        %v1202 = vpop.permute.xlu0 %1201
        %1203 = vrot.lane.b32.xlu0 %v1172, 32
        %v1204 = vpop.permute.xlu0 %1203
        %1205 = vrot.lane.b32.xlu0 %v1174, 32
        %v1206 = vpop.permute.xlu0 %1205
        %vm1223 = vcmask 294144
        %1224 = vst.msk [vmem:[#allocation3] sm:$0xff] %vm1223, %v1176
        %1225 = vst.msk [vmem:[#allocation3 + $0x8] sm:$0xff] %vm1223, %v1178
        %1226 = vst.msk [vmem:[#allocation3 + $0x10] sm:$0xff] %vm1223, %v1180
        %1227 = vst.msk [vmem:[#allocation3 + $0x18] sm:$0xff] %vm1223, %v1182
        %1228 = vst.msk [vmem:[#allocation3 + $0x20] sm:$0xff] %vm1223, %v1184
        %1229 = vst.msk [vmem:[#allocation3 + $0x28] sm:$0xff] %vm1223, %v1186
        %1230 = vst.msk [vmem:[#allocation3 + $0x30] sm:$0xff] %vm1223, %v1188
        %1231 = vst.msk [vmem:[#allocation3 + $0x38] sm:$0xff] %vm1223, %v1190
        %1232 = vst.msk [vmem:[#allocation3 + $0x40] sm:$0xff] %vm1223, %v1192
        %1233 = vst.msk [vmem:[#allocation3 + $0x48] sm:$0xff] %vm1223, %v1194
        %1234 = vst.msk [vmem:[#allocation3 + $0x50] sm:$0xff] %vm1223, %v1196
        %1235 = vst.msk [vmem:[#allocation3 + $0x58] sm:$0xff] %vm1223, %v1198
        %1236 = vst.msk [vmem:[#allocation3 + $0x60] sm:$0xff] %vm1223, %v1200
        %1237 = vst.msk [vmem:[#allocation3 + $0x68] sm:$0xff] %vm1223, %v1202
        %1238 = vst.msk [vmem:[#allocation3 + $0x70] sm:$0xff] %vm1223, %v1204
        %1239 = vst.msk [vmem:[#allocation3 + $0x78] sm:$0xff] %vm1223, %v1206
        %v1240 = vld [vmem:[#allocation3] sm:$0xff]
        %v1241 = vld [vmem:[#allocation3 + $0x8] sm:$0xff]
        %v1242 = vld [vmem:[#allocation3 + $0x10] sm:$0xff]
        %v1243 = vld [vmem:[#allocation3 + $0x18] sm:$0xff]
        %v1244 = vld [vmem:[#allocation3 + $0x20] sm:$0xff]
        %v1245 = vld [vmem:[#allocation3 + $0x28] sm:$0xff]
        %v1246 = vld [vmem:[#allocation3 + $0x30] sm:$0xff]
        %v1247 = vld [vmem:[#allocation3 + $0x38] sm:$0xff]
        %v1248 = vld [vmem:[#allocation3 + $0x40] sm:$0xff]
        %v1249 = vld [vmem:[#allocation3 + $0x48] sm:$0xff]
        %v1250 = vld [vmem:[#allocation3 + $0x50] sm:$0xff]
        %v1251 = vld [vmem:[#allocation3 + $0x58] sm:$0xff]
        %v1252 = vld [vmem:[#allocation3 + $0x60] sm:$0xff]
        %v1253 = vld [vmem:[#allocation3 + $0x68] sm:$0xff]
        %v1254 = vld [vmem:[#allocation3 + $0x70] sm:$0xff]
        %v1255 = vld [vmem:[#allocation3 + $0x78] sm:$0xff]
        %v1256 = vld [vmem:[%s1] sm:$0xff]
        %v1257 = vld [vmem:[%s1 + $0x8] sm:$0xff]
        %v1258 = vld [vmem:[%s1 + $0x10] sm:$0xff]
        %v1259 = vld [vmem:[%s1 + $0x18] sm:$0xff]
        %v1260 = vld [vmem:[%s1 + $0x20] sm:$0xf]
        %v1261 = vld [vmem:[%s2] sm:$0x1]
        %v1263 = vlaneseq
        %v1264 = vshrl.u32 %v1263, 7
        %v1265 = vsub.s32 0, %v1264
        %v1266 = vrot.slane %v1261, %v1265
        %vm1268 = vcmask 293888
        %v1270 = vsel %vm1268, %v1240, 0
        %v1273 = vsel %vm1268, %v1241, 0
        %v1276 = vsel %vm1268, %v1242, 0
        %v1279 = vsel %vm1268, %v1243, 0
        %v1282 = vsel %vm1268, %v1244, 0
        %v1285 = vsel %vm1268, %v1245, 0
        %v1288 = vsel %vm1268, %v1246, 0
        %v1291 = vsel %vm1268, %v1247, 0
        %v1294 = vsel %vm1268, %v1248, 0
        %v1297 = vsel %vm1268, %v1249, 0
        %v1300 = vsel %vm1268, %v1250, 0
        %v1303 = vsel %vm1268, %v1251, 0
        %v1306 = vsel %vm1268, %v1252, 0
        %v1309 = vsel %vm1268, %v1253, 0
        %v1312 = vsel %vm1268, %v1254, 0
        %v1315 = vsel %vm1268, %v1255, 0
        %vm1317 = vcmask 1043456
        %v1319 = vsel %vm1317, %v1260, 0
        %1321 = vmatprep.subr.mxu0 0.0
        %1322 = vmatpush1.msra.mxu0 0.0
        %1323 = vmatprep.subr.mxu0 0.0
        %1324 = vmatpush1.msra.mxu0 0.0
        %1325 = vmatprep.subr.mxu0 0.0
        %1326 = vmatpush1.msra.mxu0 0.0
        %1327 = vmatprep.subr.mxu0 0.0
        %1328 = vmatpush1.msra.mxu0 0.0
        %1329 = vmatprep.subr.mxu0 0.0
        %1330 = vmatpush1.msra.mxu0 0.0
        %1331 = vmatprep.subr.mxu0 0.0
        %1332 = vmatpush1.msra.mxu0 0.0
        %1333 = vmatprep.subr.mxu0 0.0
        %1334 = vmatpush1.msra.mxu0 0.0
        %1335 = vmatprep.subr.mxu0 0.0
        %1336 = vmatpush1.msra.mxu0 0.0
        %1337 = vmatprep.subr.mxu0 0.0
        %1338 = vmatpush1.msra.mxu0 0.0
        %1339 = vmatprep.subr.mxu0 0.0
        %1340 = vmatpush1.msra.mxu0 0.0
        %1341 = vmatprep.subr.mxu0 0.0
        %1342 = vmatpush1.msra.mxu0 0.0
        %1343 = vmatprep.subr.mxu0 0.0
        %1344 = vmatpush1.msra.mxu0 %v1319
        %1345 = vmatprep.subr.mxu0 0.0
        %1346 = vmatpush1.msra.mxu0 %v1259
        %1347 = vmatprep.subr.mxu0 0.0
        %1348 = vmatpush1.msra.mxu0 %v1258
        %1349 = vmatprep.subr.mxu0 0.0
        %1350 = vmatpush1.msra.mxu0 %v1257
        %1351 = vmatprep.subr.mxu0 0.0
        %1352 = vmatpush1.msra.mxu0 %v1256
        %1353 = vmatprep.subr.mxu0 0.0
        %1354 = vmatpush2.msra.mxu0 0.0
        %1355 = vmatprep.subr.mxu0 0.0
        %1356 = vmatpush2.msra.mxu0 0.0
        %1357 = vmatprep.subr.mxu0 0.0
        %1358 = vmatpush2.msra.mxu0 0.0
        %1359 = vmatprep.subr.mxu0 0.0
        %1360 = vmatpush2.msra.mxu0 0.0
        %1361 = vmatprep.subr.mxu0 0.0
        %1362 = vmatpush2.msra.mxu0 0.0
        %1363 = vmatprep.subr.mxu0 0.0
        %1364 = vmatpush2.msra.mxu0 0.0
        %1365 = vmatprep.subr.mxu0 0.0
        %1366 = vmatpush2.msra.mxu0 0.0
        %1367 = vmatprep.subr.mxu0 0.0
        %1368 = vmatpush2.msra.mxu0 0.0
        %1369 = vmatprep.subr.mxu0 0.0
        %1370 = vmatpush2.msra.mxu0 0.0
        %1371 = vmatprep.subr.mxu0 0.0
        %1372 = vmatpush2.msra.mxu0 0.0
        %1373 = vmatprep.subr.mxu0 0.0
        %1374 = vmatpush2.msra.mxu0 0.0
        %1375 = vmatprep.subr.mxu0 0.0
        %1376 = vmatpush2.msra.mxu0 0.0
        %1377 = vmatprep.subr.mxu0 0.0
        %1378 = vmatpush2.msra.mxu0 0.0
        %1379 = vmatprep.subr.mxu0 0.0
        %1380 = vmatpush2.msra.mxu0 0.0
        %1381 = vmatprep.subr.mxu0 0.0
        %1382 = vmatpush2.msra.mxu0 0.0
        %1383 = vmatprep.subr.mxu0 0.0
        %1384 = vmatpush2.msra.mxu0 0.0
        %1385 = vmatprep.mubr.f32.mxu0 0.0
        %1386 = vmatmul.mubr.f32.gmra.mxu0 %v1270
        %v1387 = vpop.f32.mrf.mxu0
        %v1388 = vadd.f32 %v1266, %v1387
        %v1389 = vpop.f32.mrf.mxu0
        %1390 = vmatprep.mubr.f32.mxu0 0.0
        %1391 = vmatmul.mubr.f32.gmra.mxu0 %v1273
        %v1392 = vpop.f32.mrf.mxu0
        %v1393 = vadd.f32 %v1266, %v1392
        %v1394 = vpop.f32.mrf.mxu0
        %1395 = vmatprep.mubr.f32.mxu0 0.0
        %1396 = vmatmul.mubr.f32.gmra.mxu0 %v1276
        %v1397 = vpop.f32.mrf.mxu0
        %v1398 = vadd.f32 %v1266, %v1397
        %v1399 = vpop.f32.mrf.mxu0
        %1400 = vmatprep.mubr.f32.mxu0 0.0
        %1401 = vmatmul.mubr.f32.gmra.mxu0 %v1279
        %v1402 = vpop.f32.mrf.mxu0
        %v1403 = vadd.f32 %v1266, %v1402
        %v1404 = vpop.f32.mrf.mxu0
        %1405 = vmatprep.mubr.f32.mxu0 0.0
        %1406 = vmatmul.mubr.f32.gmra.mxu0 %v1282
        %v1407 = vpop.f32.mrf.mxu0
        %v1408 = vadd.f32 %v1266, %v1407
        %v1409 = vpop.f32.mrf.mxu0
        %1410 = vmatprep.mubr.f32.mxu0 0.0
        %1411 = vmatmul.mubr.f32.gmra.mxu0 %v1285
        %v1412 = vpop.f32.mrf.mxu0
        %v1413 = vadd.f32 %v1266, %v1412
        %v1414 = vpop.f32.mrf.mxu0
        %1415 = vmatprep.mubr.f32.mxu0 0.0
        %1416 = vmatmul.mubr.f32.gmra.mxu0 %v1288
        %v1417 = vpop.f32.mrf.mxu0
        %v1418 = vadd.f32 %v1266, %v1417
        %v1419 = vpop.f32.mrf.mxu0
        %1420 = vmatprep.mubr.f32.mxu0 0.0
        %1421 = vmatmul.mubr.f32.gmra.mxu0 %v1291
        %v1422 = vpop.f32.mrf.mxu0
        %v1423 = vadd.f32 %v1266, %v1422
        %v1424 = vpop.f32.mrf.mxu0
        %1425 = vmatprep.mubr.f32.mxu0 0.0
        %1426 = vmatmul.mubr.f32.gmra.mxu0 %v1294
        %v1427 = vpop.f32.mrf.mxu0
        %v1428 = vadd.f32 %v1266, %v1427
        %v1429 = vpop.f32.mrf.mxu0
        %1430 = vmatprep.mubr.f32.mxu0 0.0
        %1431 = vmatmul.mubr.f32.gmra.mxu0 %v1297
        %v1432 = vpop.f32.mrf.mxu0
        %v1433 = vadd.f32 %v1266, %v1432
        %v1434 = vpop.f32.mrf.mxu0
        %1435 = vmatprep.mubr.f32.mxu0 0.0
        %1436 = vmatmul.mubr.f32.gmra.mxu0 %v1300
        %v1437 = vpop.f32.mrf.mxu0
        %v1438 = vadd.f32 %v1266, %v1437
        %v1439 = vpop.f32.mrf.mxu0
        %1440 = vmatprep.mubr.f32.mxu0 0.0
        %1441 = vmatmul.mubr.f32.gmra.mxu0 %v1303
        %v1442 = vpop.f32.mrf.mxu0
        %v1443 = vadd.f32 %v1266, %v1442
        %v1444 = vpop.f32.mrf.mxu0
        %1445 = vmatprep.mubr.f32.mxu0 0.0
        %1446 = vmatmul.mubr.f32.gmra.mxu0 %v1306
        %v1447 = vpop.f32.mrf.mxu0
        %v1448 = vadd.f32 %v1266, %v1447
        %v1449 = vpop.f32.mrf.mxu0
        %1450 = vmatprep.mubr.f32.mxu0 0.0
        %1451 = vmatmul.mubr.f32.gmra.mxu0 %v1309
        %v1452 = vpop.f32.mrf.mxu0
        %v1453 = vadd.f32 %v1266, %v1452
        %v1454 = vpop.f32.mrf.mxu0
        %1455 = vmatprep.mubr.f32.mxu0 0.0
        %1456 = vmatmul.mubr.f32.gmra.mxu0 %v1312
        %v1457 = vpop.f32.mrf.mxu0
        %v1458 = vadd.f32 %v1266, %v1457
        %v1459 = vpop.f32.mrf.mxu0
        %1460 = vmatprep.mubr.f32.mxu0 0.0
        %1461 = vmatmul.mubr.f32.gmra.mxu0 %v1315
        %v1462 = vpop.f32.mrf.mxu0
        %v1463 = vadd.f32 %v1266, %v1462
        %v1464 = vpop.f32.mrf.mxu0
        %1465 = vdwg.mxu0
        %v1466 = vmax.f32 %v1388, 0.0
        %v1467 = vmax.f32 %v1393, 0.0
        %v1468 = vmax.f32 %v1398, 0.0
        %v1469 = vmax.f32 %v1403, 0.0
        %v1470 = vmax.f32 %v1408, 0.0
        %v1471 = vmax.f32 %v1413, 0.0
        %v1472 = vmax.f32 %v1418, 0.0
        %v1473 = vmax.f32 %v1423, 0.0
        %v1474 = vmax.f32 %v1428, 0.0
        %v1475 = vmax.f32 %v1433, 0.0
        %v1476 = vmax.f32 %v1438, 0.0
        %v1477 = vmax.f32 %v1443, 0.0
        %v1478 = vmax.f32 %v1448, 0.0
        %v1479 = vmax.f32 %v1453, 0.0
        %v1480 = vmax.f32 %v1458, 0.0
        %v1481 = vmax.f32 %v1463, 0.0
        %1482 = vxpose.xlu0.b32.start [1/16] %v1466, 128
        %1483 = vxpose.xlu0.b32.cont [2/16] %v1467, 128
        %1484 = vxpose.xlu0.b32.cont [3/16] %v1468, 128
        %1485 = vxpose.xlu0.b32.cont [4/16] %v1469, 128
        %1486 = vxpose.xlu0.b32.cont [5/16] %v1470, 128
        %1487 = vxpose.xlu0.b32.cont [6/16] %v1471, 128
        %1488 = vxpose.xlu0.b32.cont [7/16] %v1472, 128
        %1489 = vxpose.xlu0.b32.cont [8/16] %v1473, 128
        %1490 = vxpose.xlu0.b32.cont [9/16] %v1474, 128
        %1491 = vxpose.xlu0.b32.cont [10/16] %v1475, 128
        %1492 = vxpose.xlu0.b32.cont [11/16] %v1476, 128
        %1493 = vxpose.xlu0.b32.cont [12/16] %v1477, 128
        %1494 = vxpose.xlu0.b32.cont [13/16] %v1478, 128
        %1495 = vxpose.xlu0.b32.cont [14/16] %v1479, 128
        %1496 = vxpose.xlu0.b32.cont [15/16] %v1480, 128
        %1497 = vxpose.xlu0.b32.end [16/16] %v1481, 128
        %v1498 = vpop.trf.xlu0
        %v1499 = vpop.trf.xlu0
        %v1500 = vpop.trf.xlu0
        %v1501 = vpop.trf.xlu0
        %v1502 = vpop.trf.xlu0
        %v1503 = vpop.trf.xlu0
        %v1504 = vpop.trf.xlu0
        %v1505 = vpop.trf.xlu0
        %v1506 = vpop.trf.xlu0
        %v1507 = vpop.trf.xlu0
        %v1508 = vpop.trf.xlu0
        %v1509 = vpop.trf.xlu0
        %v1510 = vpop.trf.xlu0
        %v1511 = vpop.trf.xlu0
        %v1512 = vpop.trf.xlu0
        %v1513 = vpop.trf.xlu0
        %1514 = vst [vmem:[%s177] sm:$0xff] %v1498
        %s1515 = sand.u32 %s107, 1
        %s1516 = scalar_lea.sflag [#allocation5], %s1515
        %s1517 = sand.u32 %s107, 1
        %s1518 = smul.addr %s1517, 8
        %s1519 = scalar_lea.vmem [#allocation4], %s1518
        // Predicated region
        $region37: #{tpu_custom_call.1} parent=31 // pred_check
          %p1520 = pneg %p117
        $region38: #{tpu_custom_call.1} parent=31 // pred_check_branch
          %1522 = sbr.rel (%p1520) target = $region40
        $region39: #{tpu_custom_call.1} parent=31 // pred_region
          %s1524 = ssub.s32 128, 128
          %1525 = vsyncadd %s1516, %s1524
          %s1526 = smul.addr %s21, 2
          %s1527 = sadd.s32 %s22, %s1526
          %s1528 = smul.addr %s1527, 128
          %s1529 = scalar_lea.hbm %s3, %s1528
          %s1531 = sshll.u32 %s1519, 4
          %s1532 = int_to_ptr.vmem [resolvable:$true] %s1531
          %1534 = dma.vmem_to_hbm [thread:$0]  %s1532, 128, %s1529, %s1516
        $region40: #{tpu_custom_call.1} parent=31 // pred_fallthru
          _
      $region32: #{tpu_custom_call.1} parent=5 // pred_fallthru
        _
      %p1535 = scmp.le.s32.totalorder 2, %s12
      // Predicated region
      $region41: #{tpu_custom_call.1} parent=5 // pred_check
        %p1536 = pneg %p1535
      $region42: #{tpu_custom_call.1} parent=5 // pred_check_branch
        %1538 = sbr.rel (%p1536) target = $region44
      $region43: #{tpu_custom_call.1} parent=5 // pred_region
        %s1539 = ssub.s32 %s12, 2
        // Predicated region
        $region45: #{tpu_custom_call.1} parent=43 // pred_check
          %p1540 = pneg %p123
        $region46: #{tpu_custom_call.1} parent=43 // pred_check_branch
          %1542 = sbr.rel (%p1540) target = $region48
        $region47: #{tpu_custom_call.1} parent=43 // pred_region
          %s1543 = sand.u32 %s108, 1
          %s1544 = scalar_lea.sflag [#allocation5], %s1543
          %s1545 = sand.u32 %s108, 1
          %s1546 = smul.addr %s1545, 8
          %s1547 = scalar_lea.vmem [#allocation4], %s1546
          %1548 = dma.done %s1544, 128
        $region48: #{tpu_custom_call.1} parent=43 // pred_fallthru
          _
      $region44: #{tpu_custom_call.1} parent=5 // pred_fallthru
        _
    $region6: #{tpu_custom_call.1} parent=1 // loop_footer
      %s16 = sadd.s32 1, %s12
    $region7: #{tpu_custom_call.1} parent=1 // loop_footer_branch
      %11 = sbr.rel target = $region3
    $region8: #{tpu_custom_call.1} parent=1 // loop_exit
      _
    %1549 = vsyncpa [#allocation5], 1
    %s1550 = scalar_lea.sflag [#allocation5], 1
    %1551 = vsyncpa %s1550, 1

</llo_original>
